<compile_context>
chip_gen: v5e
topology: v5e:2x2
jax: 0.10.0
libtpu: 0.0.40
codegen_flags: <defaults>
</compile_context>

<pallas_src>
import functools

import jax
import jax.numpy as jnp
from jax.experimental import pallas as pl
from jax.experimental.pallas import tpu as pltpu


def _dilation_block_kernel(x_ref, w_ref, b_ref, o_ref, *, dilations, T, HW):
    # x_ref: (1, Cin, T*HW)          one batch element, channels-first, lane=T*HW
    # w_ref: (L, 3, Cout, Cin)       conv taps, BN scale pre-folded
    # b_ref: (L, Cout, 1)            folded BN bias (lane-broadcast column)
    # o_ref: (1, Cout, T_total*HW)   per-layer outputs concatenated along T
    t_off = 0
    for l, d in enumerate(dilations):              # static unroll over layers
        T_out = T - 2 * d

        def tap(k):
            # Small (Cout, Cin) LHS streamed against a wide lane-dense RHS.
            rhs = x_ref[0, :, k * d * HW:(k * d + T_out) * HW]   # (Cin, T_out*HW)
            return jnp.dot(w_ref[l, k], rhs,
                           preferred_element_type=jnp.float32)   # (Cout, T_out*HW)

        acc = tap(0)
        acc = acc + tap(1)
        acc = acc + tap(2)
        y = jnp.maximum(acc + b_ref[l], 0.0)       # bias + ReLU (BN folded)
        o_ref[0, :, t_off * HW:(t_off + T_out) * HW] = y.astype(o_ref.dtype)
        t_off += T_out


def dilation_block_forward(x_ncthw, params):
    """x_ncthw: (N, C_in, T, H, W) -> (N, C_out, sum_l(T - 2*d_l), H, W)."""
    N, C, T, H, W = x_ncthw.shape
    HW = H * W
    # Contiguous reshape only -- no transpose, PyTorch layout is kernel-native.
    x = x_ncthw.reshape(N, C, T * HW)

    dilations = tuple(int(p["dilation"]) for p in params)
    L = len(params)
    Cout = params[0]["w_folded"].shape[1]
    w_stack = jnp.stack([p["w_folded"] for p in params])      # (L, 3, Cout, Cin)
    b_stack = jnp.stack([p["bias_col"] for p in params])      # (L, Cout, 1)
    t_outs = [T - 2 * d for d in dilations]
    T_total = sum(t_outs)

    kernel = functools.partial(_dilation_block_kernel,
                               dilations=dilations, T=T, HW=HW)

    flops = 2 * N * HW * sum(3 * C * Cout * to for to in t_outs)
    bytes_accessed = 4 * (x.size + w_stack.size + b_stack.size
                          + N * Cout * T_total * HW)

    y = pl.pallas_call(
        kernel,
        out_shape=jax.ShapeDtypeStruct((N, Cout, T_total * HW), x.dtype),
        grid_spec=pltpu.PrefetchScalarGridSpec(
            num_scalar_prefetch=0,
            grid=(N,),
            in_specs=[
                pl.BlockSpec((1, C, T * HW), lambda n: (n, 0, 0)),
                pl.BlockSpec((L, 3, Cout, C), lambda n: (0, 0, 0, 0)),
                pl.BlockSpec((L, Cout, 1), lambda n: (0, 0, 0)),
            ],
            out_specs=pl.BlockSpec((1, Cout, T_total * HW),
                                   lambda n: (n, 0, 0)),
        ),
        compiler_params=pltpu.CompilerParams(
            dimension_semantics=("parallel",)),
        cost_estimate=pl.CostEstimate(flops=int(flops),
                                      transcendentals=0,
                                      bytes_accessed=int(bytes_accessed)),
    )(x, w_stack, b_stack)

    return y.reshape(N, Cout, T_total, H, W)


def init_dilation_block_params(key, in_ch, out_ch, num_layer, step=1, eps=1e-5):
    params = []
    for n in range(num_layer):
        key, kw, kg, kb, km, kv = jax.random.split(key, 6)
        # PyTorch conv weight is (out_ch, in_ch, 3, 1, 1); trailing (1,1) squeezed.
        w = jax.random.normal(kw, (out_ch, in_ch, 3), jnp.float32) * 0.1
        gamma = jax.random.uniform(kg, (out_ch,), jnp.float32, 0.5, 1.5)
        beta = jax.random.normal(kb, (out_ch,), jnp.float32) * 0.1
        rmean = jax.random.normal(km, (out_ch,), jnp.float32) * 0.1
        rvar = jax.random.uniform(kv, (out_ch,), jnp.float32, 0.5, 1.5)
        scale = gamma / jnp.sqrt(rvar + eps)
        bias = beta - rmean * scale
        w_koc = jnp.transpose(w, (2, 0, 1))                 # (3, out_ch, in_ch)
        params.append(dict(
            w=w_koc,                                        # reference (unfolded)
            scale=scale,                                    # reference (unfolded)
            bias=bias,                                      # reference
            w_folded=w_koc * scale[None, :, None],          # BN scale folded in
            bias_col=bias.reshape(out_ch, 1),               # (Cout, 1) for kernel
            dilation=n * step + 1,
        ))
    return params


def reference_forward(x_ncthw, params):
    N, C, T, H, W = x_ncthw.shape
    outs = []
    for p in params:
        d = int(p["dilation"])
        T_out = T - 2 * d
        acc = jnp.zeros((N, p["w"].shape[1], T_out, H, W), jnp.float32)
        for k in range(3):
            xs = x_ncthw[:, :, k * d:k * d + T_out]          # (N, Cin, T_out, H, W)
            acc = acc + jnp.einsum("ncthw,oc->nothw", xs, p["w"][k])
        y = acc * p["scale"][None, :, None, None, None] \
            + p["bias"][None, :, None, None, None]
        outs.append(jnp.maximum(y, 0.0))
    return jnp.concatenate(outs, axis=2)


if __name__ == "__main__":
    key = jax.random.PRNGKey(0)
    key, kx = jax.random.split(key)

    # Small shapes consistent with the module's forward (N, C_in, T, H, W).
    N, in_ch, out_ch, T, H, W = 2, 4, 8, 16, 8, 8
    num_layer, step = 3, 1

    x = jax.random.normal(kx, (N, in_ch, T, H, W), jnp.float32)
    params = init_dilation_block_params(key, in_ch, out_ch, num_layer, step)

    out = jax.block_until_ready(dilation_block_forward(x, params))

    ref = reference_forward(x, params)
    expected_T = sum(T - 2 * (n * step + 1) for n in range(num_layer))
    assert out.shape == (N, out_ch, expected_T, H, W), out.shape
    assert jnp.allclose(out, ref, atol=1e-4, rtol=1e-4), "mismatch vs reference"

    print("KERNEL_OK")
</pallas_src>

<mosaic_0001>
module attributes {stable_mosaic.version = 11 : i64} {
  func.func @_dilation_block_kernel(%arg0: i32, %arg1: memref<1x4x1024xf32, #tpu.memory_space<vmem>>, %arg2: memref<3x3x8x4xf32, #tpu.memory_space<vmem>>, %arg3: memref<3x8x1xf32, #tpu.memory_space<vmem>>, %arg4: memref<1x8x2304xf32, #tpu.memory_space<vmem>>) attributes {dimension_semantics = [#tpu.dimension_semantics<parallel>], iteration_bounds = array<i64: 2>, scalar_prefetch = 0 : i64, scratch_operands = 0 : i64, tpu.core_type = #tpu.core_type<tc>, window_params = [{transform_indices = @transform_0, window_bounds = array<i64: 1, 4, 1024>}, {pipeline_mode = #tpu.pipeline_mode<synchronous>, transform_indices = @transform_1, window_bounds = array<i64: 3, 3, 8, 4>}, {pipeline_mode = #tpu.pipeline_mode<synchronous>, transform_indices = @transform_2, window_bounds = array<i64: 3, 8, 1>}, {transform_indices = @transform_3, window_bounds = array<i64: 1, 8, 2304>}]} {
    %c0 = arith.constant 0 : index
    %c0_0 = arith.constant 0 : index
    %c0_1 = arith.constant 0 : index
    %0 = vector.load %arg1[%c0, %c0_0, %c0_1] : memref<1x4x1024xf32, #tpu.memory_space<vmem>>, vector<1x4x896xf32>
    %1 = vector.shape_cast %0 : vector<1x4x896xf32> to vector<4x896xf32>
    %c0_2 = arith.constant 0 : index
    %c0_3 = arith.constant 0 : index
    %c0_4 = arith.constant 0 : index
    %c0_5 = arith.constant 0 : index
    %2 = vector.load %arg2[%c0_2, %c0_3, %c0_4, %c0_5] : memref<3x3x8x4xf32, #tpu.memory_space<vmem>>, vector<1x1x8x4xf32>
    %3 = vector.shape_cast %2 : vector<1x1x8x4xf32> to vector<8x4xf32>
    %cst = arith.constant dense<0.000000e+00> : vector<8x896xf32>
    %4 = tpu.matmul %3, %1, %cst {dimension_numbers = #tpu.dot_dimension_numbers<[1], [0], [0], [1], [0, 0, 1, 1], [], []>} : vector<8x4xf32>, vector<4x896xf32>, vector<8x896xf32> -> vector<8x896xf32>
    %c0_6 = arith.constant 0 : index
    %c0_7 = arith.constant 0 : index
    %c64 = arith.constant 64 : index
    %5 = vector.load %arg1[%c0_6, %c0_7, %c64] : memref<1x4x1024xf32, #tpu.memory_space<vmem>>, vector<1x4x896xf32>
    %6 = vector.shape_cast %5 : vector<1x4x896xf32> to vector<4x896xf32>
    %c0_8 = arith.constant 0 : index
    %c1 = arith.constant 1 : index
    %c0_9 = arith.constant 0 : index
    %c0_10 = arith.constant 0 : index
    %7 = vector.load %arg2[%c0_8, %c1, %c0_9, %c0_10] : memref<3x3x8x4xf32, #tpu.memory_space<vmem>>, vector<1x1x8x4xf32>
    %8 = vector.shape_cast %7 : vector<1x1x8x4xf32> to vector<8x4xf32>
    %cst_11 = arith.constant dense<0.000000e+00> : vector<8x896xf32>
    %9 = tpu.matmul %8, %6, %cst_11 {dimension_numbers = #tpu.dot_dimension_numbers<[1], [0], [0], [1], [0, 0, 1, 1], [], []>} : vector<8x4xf32>, vector<4x896xf32>, vector<8x896xf32> -> vector<8x896xf32>
    %10 = arith.addf %4, %9 : vector<8x896xf32>
    %c0_12 = arith.constant 0 : index
    %c0_13 = arith.constant 0 : index
    %c128 = arith.constant 128 : index
    %11 = vector.load %arg1[%c0_12, %c0_13, %c128] : memref<1x4x1024xf32, #tpu.memory_space<vmem>>, vector<1x4x896xf32>
    %12 = vector.shape_cast %11 : vector<1x4x896xf32> to vector<4x896xf32>
    %c0_14 = arith.constant 0 : index
    %c2 = arith.constant 2 : index
    %c0_15 = arith.constant 0 : index
    %c0_16 = arith.constant 0 : index
    %13 = vector.load %arg2[%c0_14, %c2, %c0_15, %c0_16] : memref<3x3x8x4xf32, #tpu.memory_space<vmem>>, vector<1x1x8x4xf32>
    %14 = vector.shape_cast %13 : vector<1x1x8x4xf32> to vector<8x4xf32>
    %cst_17 = arith.constant dense<0.000000e+00> : vector<8x896xf32>
    %15 = tpu.matmul %14, %12, %cst_17 {dimension_numbers = #tpu.dot_dimension_numbers<[1], [0], [0], [1], [0, 0, 1, 1], [], []>} : vector<8x4xf32>, vector<4x896xf32>, vector<8x896xf32> -> vector<8x896xf32>
    %16 = arith.addf %10, %15 : vector<8x896xf32>
    %c0_18 = arith.constant 0 : index
    %c0_19 = arith.constant 0 : index
    %c0_20 = arith.constant 0 : index
    %17 = vector.load %arg3[%c0_18, %c0_19, %c0_20] : memref<3x8x1xf32, #tpu.memory_space<vmem>>, vector<1x8x1xf32>
    %18 = vector.shape_cast %17 : vector<1x8x1xf32> to vector<8x1xf32>
    %19 = vector.broadcast %18 : vector<8x1xf32> to vector<8x896xf32>
    %20 = arith.addf %16, %19 : vector<8x896xf32>
    %cst_21 = arith.constant 0.000000e+00 : f32
    %21 = vector.broadcast %cst_21 : f32 to vector<8x896xf32>
    %22 = arith.maximumf %20, %21 : vector<8x896xf32>
    %c0_22 = arith.constant 0 : index
    %c0_23 = arith.constant 0 : index
    %c0_24 = arith.constant 0 : index
    %23 = vector.load %arg4[%c0_22, %c0_23, %c0_24] : memref<1x8x2304xf32, #tpu.memory_space<vmem>>, vector<1x8x896xf32>
    %24 = vector.shape_cast %23 : vector<1x8x896xf32> to vector<8x896xf32>
    %25 = vector.shape_cast %22 : vector<8x896xf32> to vector<1x8x896xf32>
    tpu.vector_store %arg4[%c0_22, %c0_23, %c0_24], %25 {strides = array<i32>} : memref<1x8x2304xf32, #tpu.memory_space<vmem>>, vector<1x8x896xf32>,
    %c0_25 = arith.constant 0 : index
    %c0_26 = arith.constant 0 : index
    %c0_27 = arith.constant 0 : index
    %26 = vector.load %arg1[%c0_25, %c0_26, %c0_27] : memref<1x4x1024xf32, #tpu.memory_space<vmem>>, vector<1x4x768xf32>
    %27 = vector.shape_cast %26 : vector<1x4x768xf32> to vector<4x768xf32>
    %c1_28 = arith.constant 1 : index
    %c0_29 = arith.constant 0 : index
    %c0_30 = arith.constant 0 : index
    %c0_31 = arith.constant 0 : index
    %28 = vector.load %arg2[%c1_28, %c0_29, %c0_30, %c0_31] : memref<3x3x8x4xf32, #tpu.memory_space<vmem>>, vector<1x1x8x4xf32>
    %29 = vector.shape_cast %28 : vector<1x1x8x4xf32> to vector<8x4xf32>
    %cst_32 = arith.constant dense<0.000000e+00> : vector<8x768xf32>
    %30 = tpu.matmul %29, %27, %cst_32 {dimension_numbers = #tpu.dot_dimension_numbers<[1], [0], [0], [1], [0, 0, 1, 1], [], []>} : vector<8x4xf32>, vector<4x768xf32>, vector<8x768xf32> -> vector<8x768xf32>
    %c0_33 = arith.constant 0 : index
    %c0_34 = arith.constant 0 : index
    %c128_35 = arith.constant 128 : index
    %31 = vector.load %arg1[%c0_33, %c0_34, %c128_35] : memref<1x4x1024xf32, #tpu.memory_space<vmem>>, vector<1x4x768xf32>
    %32 = vector.shape_cast %31 : vector<1x4x768xf32> to vector<4x768xf32>
    %c1_36 = arith.constant 1 : index
    %c1_37 = arith.constant 1 : index
    %c0_38 = arith.constant 0 : index
    %c0_39 = arith.constant 0 : index
    %33 = vector.load %arg2[%c1_36, %c1_37, %c0_38, %c0_39] : memref<3x3x8x4xf32, #tpu.memory_space<vmem>>, vector<1x1x8x4xf32>
    %34 = vector.shape_cast %33 : vector<1x1x8x4xf32> to vector<8x4xf32>
    %cst_40 = arith.constant dense<0.000000e+00> : vector<8x768xf32>
    %35 = tpu.matmul %34, %32, %cst_40 {dimension_numbers = #tpu.dot_dimension_numbers<[1], [0], [0], [1], [0, 0, 1, 1], [], []>} : vector<8x4xf32>, vector<4x768xf32>, vector<8x768xf32> -> vector<8x768xf32>
    %36 = arith.addf %30, %35 : vector<8x768xf32>
    %c0_41 = arith.constant 0 : index
    %c0_42 = arith.constant 0 : index
    %c256 = arith.constant 256 : index
    %37 = vector.load %arg1[%c0_41, %c0_42, %c256] : memref<1x4x1024xf32, #tpu.memory_space<vmem>>, vector<1x4x768xf32>
    %38 = vector.shape_cast %37 : vector<1x4x768xf32> to vector<4x768xf32>
    %c1_43 = arith.constant 1 : index
    %c2_44 = arith.constant 2 : index
    %c0_45 = arith.constant 0 : index
    %c0_46 = arith.constant 0 : index
    %39 = vector.load %arg2[%c1_43, %c2_44, %c0_45, %c0_46] : memref<3x3x8x4xf32, #tpu.memory_space<vmem>>, vector<1x1x8x4xf32>
    %40 = vector.shape_cast %39 : vector<1x1x8x4xf32> to vector<8x4xf32>
    %cst_47 = arith.constant dense<0.000000e+00> : vector<8x768xf32>
    %41 = tpu.matmul %40, %38, %cst_47 {dimension_numbers = #tpu.dot_dimension_numbers<[1], [0], [0], [1], [0, 0, 1, 1], [], []>} : vector<8x4xf32>, vector<4x768xf32>, vector<8x768xf32> -> vector<8x768xf32>
    %42 = arith.addf %36, %41 : vector<8x768xf32>
    %c1_48 = arith.constant 1 : index
    %c0_49 = arith.constant 0 : index
    %c0_50 = arith.constant 0 : index
    %43 = vector.load %arg3[%c1_48, %c0_49, %c0_50] : memref<3x8x1xf32, #tpu.memory_space<vmem>>, vector<1x8x1xf32>
    %44 = vector.shape_cast %43 : vector<1x8x1xf32> to vector<8x1xf32>
    %45 = vector.broadcast %44 : vector<8x1xf32> to vector<8x768xf32>
    %46 = arith.addf %42, %45 : vector<8x768xf32>
    %cst_51 = arith.constant 0.000000e+00 : f32
    %47 = vector.broadcast %cst_51 : f32 to vector<8x768xf32>
    %48 = arith.maximumf %46, %47 : vector<8x768xf32>
    %c0_52 = arith.constant 0 : index
    %c0_53 = arith.constant 0 : index
    %c896 = arith.constant 896 : index
    %49 = vector.load %arg4[%c0_52, %c0_53, %c896] : memref<1x8x2304xf32, #tpu.memory_space<vmem>>, vector<1x8x768xf32>
    %50 = vector.shape_cast %49 : vector<1x8x768xf32> to vector<8x768xf32>
    %51 = vector.shape_cast %48 : vector<8x768xf32> to vector<1x8x768xf32>
    tpu.vector_store %arg4[%c0_52, %c0_53, %c896], %51 {strides = array<i32>} : memref<1x8x2304xf32, #tpu.memory_space<vmem>>, vector<1x8x768xf32>,
    %c0_54 = arith.constant 0 : index
    %c0_55 = arith.constant 0 : index
    %c0_56 = arith.constant 0 : index
    %52 = vector.load %arg1[%c0_54, %c0_55, %c0_56] : memref<1x4x1024xf32, #tpu.memory_space<vmem>>, vector<1x4x640xf32>
    %53 = vector.shape_cast %52 : vector<1x4x640xf32> to vector<4x640xf32>
    %c2_57 = arith.constant 2 : index
    %c0_58 = arith.constant 0 : index
    %c0_59 = arith.constant 0 : index
    %c0_60 = arith.constant 0 : index
    %54 = vector.load %arg2[%c2_57, %c0_58, %c0_59, %c0_60] : memref<3x3x8x4xf32, #tpu.memory_space<vmem>>, vector<1x1x8x4xf32>
    %55 = vector.shape_cast %54 : vector<1x1x8x4xf32> to vector<8x4xf32>
    %cst_61 = arith.constant dense<0.000000e+00> : vector<8x640xf32>
    %56 = tpu.matmul %55, %53, %cst_61 {dimension_numbers = #tpu.dot_dimension_numbers<[1], [0], [0], [1], [0, 0, 1, 1], [], []>} : vector<8x4xf32>, vector<4x640xf32>, vector<8x640xf32> -> vector<8x640xf32>
    %c0_62 = arith.constant 0 : index
    %c0_63 = arith.constant 0 : index
    %c192 = arith.constant 192 : index
    %57 = vector.load %arg1[%c0_62, %c0_63, %c192] : memref<1x4x1024xf32, #tpu.memory_space<vmem>>, vector<1x4x640xf32>
    %58 = vector.shape_cast %57 : vector<1x4x640xf32> to vector<4x640xf32>
    %c2_64 = arith.constant 2 : index
    %c1_65 = arith.constant 1 : index
    %c0_66 = arith.constant 0 : index
    %c0_67 = arith.constant 0 : index
    %59 = vector.load %arg2[%c2_64, %c1_65, %c0_66, %c0_67] : memref<3x3x8x4xf32, #tpu.memory_space<vmem>>, vector<1x1x8x4xf32>
    %60 = vector.shape_cast %59 : vector<1x1x8x4xf32> to vector<8x4xf32>
    %cst_68 = arith.constant dense<0.000000e+00> : vector<8x640xf32>
    %61 = tpu.matmul %60, %58, %cst_68 {dimension_numbers = #tpu.dot_dimension_numbers<[1], [0], [0], [1], [0, 0, 1, 1], [], []>} : vector<8x4xf32>, vector<4x640xf32>, vector<8x640xf32> -> vector<8x640xf32>
    %62 = arith.addf %56, %61 : vector<8x640xf32>
    %c0_69 = arith.constant 0 : index
    %c0_70 = arith.constant 0 : index
    %c384 = arith.constant 384 : index
    %63 = vector.load %arg1[%c0_69, %c0_70, %c384] : memref<1x4x1024xf32, #tpu.memory_space<vmem>>, vector<1x4x640xf32>
    %64 = vector.shape_cast %63 : vector<1x4x640xf32> to vector<4x640xf32>
    %c2_71 = arith.constant 2 : index
    %c2_72 = arith.constant 2 : index
    %c0_73 = arith.constant 0 : index
    %c0_74 = arith.constant 0 : index
    %65 = vector.load %arg2[%c2_71, %c2_72, %c0_73, %c0_74] : memref<3x3x8x4xf32, #tpu.memory_space<vmem>>, vector<1x1x8x4xf32>
    %66 = vector.shape_cast %65 : vector<1x1x8x4xf32> to vector<8x4xf32>
    %cst_75 = arith.constant dense<0.000000e+00> : vector<8x640xf32>
    %67 = tpu.matmul %66, %64, %cst_75 {dimension_numbers = #tpu.dot_dimension_numbers<[1], [0], [0], [1], [0, 0, 1, 1], [], []>} : vector<8x4xf32>, vector<4x640xf32>, vector<8x640xf32> -> vector<8x640xf32>
    %68 = arith.addf %62, %67 : vector<8x640xf32>
    %c2_76 = arith.constant 2 : index
    %c0_77 = arith.constant 0 : index
    %c0_78 = arith.constant 0 : index
    %69 = vector.load %arg3[%c2_76, %c0_77, %c0_78] : memref<3x8x1xf32, #tpu.memory_space<vmem>>, vector<1x8x1xf32>
    %70 = vector.shape_cast %69 : vector<1x8x1xf32> to vector<8x1xf32>
    %71 = vector.broadcast %70 : vector<8x1xf32> to vector<8x640xf32>
    %72 = arith.addf %68, %71 : vector<8x640xf32>
    %cst_79 = arith.constant 0.000000e+00 : f32
    %73 = vector.broadcast %cst_79 : f32 to vector<8x640xf32>
    %74 = arith.maximumf %72, %73 : vector<8x640xf32>
    %c0_80 = arith.constant 0 : index
    %c0_81 = arith.constant 0 : index
    %c1664 = arith.constant 1664 : index
    %75 = vector.load %arg4[%c0_80, %c0_81, %c1664] : memref<1x8x2304xf32, #tpu.memory_space<vmem>>, vector<1x8x640xf32>
    %76 = vector.shape_cast %75 : vector<1x8x640xf32> to vector<8x640xf32>
    %77 = vector.shape_cast %74 : vector<8x640xf32> to vector<1x8x640xf32>
    tpu.vector_store %arg4[%c0_80, %c0_81, %c1664], %77 {strides = array<i32>} : memref<1x8x2304xf32, #tpu.memory_space<vmem>>, vector<1x8x640xf32>,
    return
  }
  func.func @transform_0(%arg0: i32) -> (i32, i32, i32) {
    %c0_i32 = arith.constant 0 : i32
    %c0_i32_0 = arith.constant 0 : i32
    %c0_i32_1 = arith.constant 0 : i32
    return %arg0, %c0_i32, %c0_i32_0 : i32, i32, i32
  }
  func.func @transform_1(%arg0: i32) -> (i32, i32, i32, i32) {
    %c0_i32 = arith.constant 0 : i32
    %c0_i32_0 = arith.constant 0 : i32
    %c0_i32_1 = arith.constant 0 : i32
    %c0_i32_2 = arith.constant 0 : i32
    %c0_i32_3 = arith.constant 0 : i32
    return %c0_i32, %c0_i32_0, %c0_i32_1, %c0_i32_2 : i32, i32, i32, i32
  }
  func.func @transform_2(%arg0: i32) -> (i32, i32, i32) {
    %c0_i32 = arith.constant 0 : i32
    %c0_i32_0 = arith.constant 0 : i32
    %c0_i32_1 = arith.constant 0 : i32
    %c0_i32_2 = arith.constant 0 : i32
    return %c0_i32, %c0_i32_0, %c0_i32_1 : i32, i32, i32
  }
  func.func @transform_3(%arg0: i32) -> (i32, i32, i32) {
    %c0_i32 = arith.constant 0 : i32
    %c0_i32_0 = arith.constant 0 : i32
    %c0_i32_1 = arith.constant 0 : i32
    return %arg0, %c0_i32, %c0_i32_0 : i32, i32, i32
  }
}

</mosaic_0001>

<llo_original>
// kernel: tpu_custom_call.1
$region0: #{tpu_custom_call.1}
  #allocation0 [shape = 'u32[]', space=smem, size = 0x4, offset = 0x4, fixed_abs, tag = 'smem constant byte address 0x4 - core index']
  #allocation1 [shape = 'u32[72,128]{1,0:T(1,128)}', space=vmem, size = 0x9000, scoped, tag = 'internal scratch']
  %s0 = inlined_call_operand.vmem [shape: f32[2,4,1024], index: 0, kind: input, shape index: {}]
  %s1 = inlined_call_operand.vmem [shape: f32[3,3,8,4], index: 1, kind: input, shape index: {}]
  %s2 = inlined_call_operand.vmem [shape: f32[3,8,1], index: 2, kind: input, shape index: {}]
  %s3 = inlined_call_operand.hbm [shape: f32[2,8,2304], index: 3, kind: output, shape index: {}]
  %s4 = sld [smem:[#allocation0]]
  $region45: #{tpu_custom_call.1} parent=0
    _
  %s6 = ssub.s32 1, %s4
  %s7 = scalar_select 0, %s6, %s4
  $region1: #{tpu_custom_call.1} parent=0
    #allocation2 [shape = 'u8[147456]{0}', space=vmem, size = 0x24000, scoped, tag = 'output window, operand 0']
    #allocation3 [shape = 's32[2]{0}', space=sflag, size = 0x8, scoped, tag = 'scoped memory for tpu_custom_call.1']
    %8 = vsyncpa [#allocation3], 0
    %s9 = scalar_lea.sflag [#allocation3], 1
    %10 = vsyncpa %s9, 0
    loop: start=0, step=1, limit=4
    $region2: #{tpu_custom_call.1} parent=1 // loop_pre_header
      _
    $region3: #{tpu_custom_call.1} parent=1 // loop_header
      %s12 = sphi 0, %s16
      %p13 = scmp.ge.s32.totalorder %s12, 4
      %s22 = sphi 0, %s24
      %s25 = sphi 0, %s22
      %s26 = sphi 0, %s25
      %s42 = sphi 0, %s26
      %s46 = sphi 0, %s46
      %s48 = sphi 0, %s46
      %s49 = sphi 0, %s48
      %s63 = sphi 0, %s49
      %s67 = sphi 0, %s67
      %s69 = sphi 0, %s67
      %s70 = sphi 0, %s69
      %s84 = sphi 0, %s70
      %s90 = sphi 0, %s92
      %s93 = sphi 0, %s90
      %s94 = sphi 0, %s93
      %s110 = sphi 0, %s94
    $region4: #{tpu_custom_call.1} parent=1 // loop_header_branch
      %15 = sbr.rel (%p13) target = $region8
    $region5: #{tpu_custom_call.1} parent=1 // loop_body
      %s17 = ssub.s32 %s12, 1
      %s18 = ssub.s32 %s12, 2
      %s19 = sadd.s32 %s12, 1
      %s20 = ssub.s32 %s12, %s19
      %p21 = scmp.eq.s32.totalorder %s20, 0
      %s23 = sadd.s32 %s22, 1
      %s24 = scalar_select %p21, %s22, %s23
      %p27 = pneg %p21
      %p28 = scmp.eq.s32.totalorder %s12, 1
      %p29 = por %p27, %p28
      %p30 = scmp.ne.s32.totalorder %s22, %s25
      %p31 = scmp.eq.s32.totalorder %s12, 0
      %p32 = por %p30, %p31
      %p33 = scmp.ne.s32.totalorder %s22, %s25
      %p34 = scmp.eq.s32.totalorder %s17, 1
      %p35 = por %p33, %p34
      %p36 = scmp.ne.s32.totalorder %s25, %s26
      %p37 = scmp.eq.s32.totalorder %s17, 0
      %p38 = por %p36, %p37
      %p39 = scmp.ne.s32.totalorder %s25, %s26
      %p40 = scmp.eq.s32.totalorder %s18, 1
      %p41 = por %p39, %p40
      %p43 = scmp.ne.s32.totalorder %s26, %s42
      %p44 = scmp.eq.s32.totalorder %s18, 0
      %p45 = por %p43, %p44
      %s47 = sadd.s32 %s46, 1
      %p50 = scmp.eq.s32.totalorder %s12, 1
      %p51 = scmp.ne.s32.totalorder %s46, %s48
      %p52 = scmp.eq.s32.totalorder %s12, 0
      %p53 = por %p51, %p52
      %p54 = scmp.ne.s32.totalorder %s46, %s48
      %p55 = scmp.eq.s32.totalorder %s17, 1
      %p56 = por %p54, %p55
      %p57 = scmp.ne.s32.totalorder %s48, %s49
      %p58 = scmp.eq.s32.totalorder %s17, 0
      %p59 = por %p57, %p58
      %p60 = scmp.ne.s32.totalorder %s48, %s49
      %p61 = scmp.eq.s32.totalorder %s18, 1
      %p62 = por %p60, %p61
      %p64 = scmp.ne.s32.totalorder %s49, %s63
      %p65 = scmp.eq.s32.totalorder %s18, 0
      %p66 = por %p64, %p65
      %s68 = sadd.s32 %s67, 1
      %p71 = scmp.eq.s32.totalorder %s12, 1
      %p72 = scmp.ne.s32.totalorder %s67, %s69
      %p73 = scmp.eq.s32.totalorder %s12, 0
      %p74 = por %p72, %p73
      %p75 = scmp.ne.s32.totalorder %s67, %s69
      %p76 = scmp.eq.s32.totalorder %s17, 1
      %p77 = por %p75, %p76
      %p78 = scmp.ne.s32.totalorder %s69, %s70
      %p79 = scmp.eq.s32.totalorder %s17, 0
      %p80 = por %p78, %p79
      %p81 = scmp.ne.s32.totalorder %s69, %s70
      %p82 = scmp.eq.s32.totalorder %s18, 1
      %p83 = por %p81, %p82
      %p85 = scmp.ne.s32.totalorder %s70, %s84
      %p86 = scmp.eq.s32.totalorder %s18, 0
      %p87 = por %p85, %p86
      %s88 = ssub.s32 %s12, %s19
      %p89 = scmp.eq.s32.totalorder %s88, 0
      %s91 = sadd.s32 %s90, 1
      %s92 = scalar_select %p89, %s90, %s91
      %p95 = pneg %p89
      %p96 = scmp.eq.s32.totalorder %s12, 1
      %p97 = por %p95, %p96
      %p98 = scmp.ne.s32.totalorder %s90, %s93
      %p99 = scmp.eq.s32.totalorder %s12, 0
      %p100 = por %p98, %p99
      %p101 = scmp.ne.s32.totalorder %s90, %s93
      %p102 = scmp.eq.s32.totalorder %s17, 1
      %p103 = por %p101, %p102
      %p104 = scmp.ne.s32.totalorder %s93, %s94
      %p105 = scmp.eq.s32.totalorder %s17, 0
      %p106 = por %p104, %p105
      %p107 = scmp.ne.s32.totalorder %s93, %s94
      %p108 = scmp.eq.s32.totalorder %s18, 1
      %p109 = por %p107, %p108
      %p111 = scmp.ne.s32.totalorder %s94, %s110
      %p112 = scmp.eq.s32.totalorder %s18, 0
      %p113 = por %p111, %p112
      %p114 = scmp.le.s32.totalorder 1, %s12
      %p115 = scmp.lt.s32.totalorder %s12, 3
      %p116 = pnand %p114, %p115
      %p117 = pneg %p116
      // Predicated region
      $region9: #{tpu_custom_call.1} parent=5 // pred_check
        _
      $region10: #{tpu_custom_call.1} parent=5 // pred_check_branch
        %119 = sbr.rel (%p116) target = $region12
      $region11: #{tpu_custom_call.1} parent=5 // pred_region
        %s120 = ssub.s32 %s12, 1
        // Predicated region
        $region13: #{tpu_custom_call.1} parent=11 // pred_check
          %p121 = pneg %p59
        $region14: #{tpu_custom_call.1} parent=11 // pred_check_branch
          %123 = sbr.rel (%p121) target = $region16
        $region15: #{tpu_custom_call.1} parent=11 // pred_region
          _
        $region16: #{tpu_custom_call.1} parent=11 // pred_fallthru
          _
        // Predicated region
        $region17: #{tpu_custom_call.1} parent=11 // pred_check
          %p124 = pneg %p80
        $region18: #{tpu_custom_call.1} parent=11 // pred_check_branch
          %126 = sbr.rel (%p124) target = $region20
        $region19: #{tpu_custom_call.1} parent=11 // pred_region
          _
        $region20: #{tpu_custom_call.1} parent=11 // pred_fallthru
          _
      $region12: #{tpu_custom_call.1} parent=5 // pred_fallthru
        _
      %p127 = scmp.lt.s32.totalorder %s12, 2
      // Predicated region
      $region21: #{tpu_custom_call.1} parent=5 // pred_check
        %p128 = pneg %p127
      $region22: #{tpu_custom_call.1} parent=5 // pred_check_branch
        %130 = sbr.rel (%p128) target = $region24
      $region23: #{tpu_custom_call.1} parent=5 // pred_region
        // Predicated region
        $region25: #{tpu_custom_call.1} parent=23 // pred_check
          %p131 = pneg %p32
        $region26: #{tpu_custom_call.1} parent=23 // pred_check_branch
          %133 = sbr.rel (%p131) target = $region28
        $region27: #{tpu_custom_call.1} parent=23 // pred_region
          %p134 = scmp.lt.s32.totalorder %s12, 1
          %s135 = scalar_select %p134, %s12, 1
          %s136 = smul.addr %s135, 8
          %s137 = smul.addr %s136, 4
          %s138 = scalar_lea.vmem %s0, %s137
        $region28: #{tpu_custom_call.1} parent=23 // pred_fallthru
          _
      $region24: #{tpu_custom_call.1} parent=5 // pred_fallthru
        _
      %p139 = scmp.le.s32.totalorder 1, %s12
      %p140 = scmp.lt.s32.totalorder %s12, 3
      %p141 = pnand %p139, %p140
      %p142 = pneg %p141
      // Predicated region
      $region29: #{tpu_custom_call.1} parent=5 // pred_check
        _
      $region30: #{tpu_custom_call.1} parent=5 // pred_check_branch
        %144 = sbr.rel (%p141) target = $region32
      $region31: #{tpu_custom_call.1} parent=5 // pred_region
        %s145 = ssub.s32 %s12, 1
        %p146 = scmp.lt.s32.totalorder %s17, 1
        %s147 = scalar_select %p146, %s17, 1
        %s148 = smul.addr %s147, 8
        %s149 = smul.addr %s148, 4
        %s150 = scalar_lea.vmem %s0, %s149
        %p151 = pneg %p38
        %p152 = pneg %p35
        %p153 = pneg %p59
        %p154 = pneg %p56
        %p155 = pneg %p80
        %p156 = pneg %p77
        %p157 = pneg %p106
        %p158 = pneg %p103
        %s159 = sand.u32 %s93, 1
        %s160 = scalar_lea.sflag [#allocation3], %s159
        %s161 = sand.u32 %s93, 1
        %s162 = smul.addr %s161, 144
        %s163 = scalar_lea.vmem [#allocation2], %s162
        %p164 = scmp.lt.s32.totalorder %s17, 1
        %s165 = scalar_select %p164, %s17, 1
        %s166 = smul.addr %s165, 8
        %s167 = smul.addr %s166, 4
        %s168 = scalar_lea.vmem %s0, %s167
        %v169 = vld [vmem:[%s168] sm:$0xff]
        %v170 = vld [vmem:[%s168 + $0x8] sm:$0xff]
        %v171 = vld [vmem:[%s168 + $0x10] sm:$0xff]
        %v172 = vld [vmem:[%s168 + $0x18] sm:$0xf]
        %v173 = vld [vmem:[%s1] sm:$0xff]
        %v174 = vld [vmem:[%s168] sm:$0xff]
        %v175 = vld [vmem:[%s168 + $0x8] sm:$0xff]
        %v176 = vld [vmem:[%s168 + $0x10] sm:$0xff]
        %v177 = vld [vmem:[%s168 + $0x18] sm:$0xff]
        %s178 = scalar_lea.vmem %s1, 8
        %v179 = vld [vmem:[%s178] sm:$0xff]
        %184 = vst [vmem:[#allocation1] ss:$2 sm:$0xff] %v174
        %s185 = scalar_lea.vmem [#allocation1], 16
        %186 = vst [vmem:[%s185] ss:$2 sm:$0xff] %v175
        %s187 = scalar_lea.vmem [#allocation1], 32
        %188 = vst [vmem:[%s187] ss:$2 sm:$0xff] %v176
        %s189 = scalar_lea.vmem [#allocation1], 48
        %190 = vst [vmem:[%s189] ss:$2 sm:$0xff] %v177
        %v191 = vld.sshfl [vmem:[#allocation1] sm:$0xff pattern:$0x75316420]
        %v192 = vld.sshfl [vmem:[#allocation1 + $0x8] sm:$0xff pattern:$0x75316420]
        %v193 = vld.sshfl [vmem:[#allocation1 + $0x10] sm:$0xff pattern:$0x75316420]
        %v194 = vld.sshfl [vmem:[#allocation1 + $0x18] sm:$0xff pattern:$0x75316420]
        %v195 = vld.sshfl [vmem:[#allocation1 + $0x20] sm:$0xff pattern:$0x75316420]
        %v196 = vld.sshfl [vmem:[#allocation1 + $0x28] sm:$0xff pattern:$0x75316420]
        %v197 = vld.sshfl [vmem:[#allocation1 + $0x30] sm:$0xff pattern:$0x75316420]
        %v198 = vld.sshfl [vmem:[#allocation1 + $0x38] sm:$0xff pattern:$0x75316420]
        %199 = vrot.lane.b32.xlu0 %v191, 64
        %v200 = vpop.permute.xlu0 %199
        %201 = vrot.lane.b32.xlu0 %v192, 64
        %v202 = vpop.permute.xlu0 %201
        %203 = vrot.lane.b32.xlu0 %v193, 64
        %v204 = vpop.permute.xlu0 %203
        %205 = vrot.lane.b32.xlu0 %v194, 64
        %v206 = vpop.permute.xlu0 %205
        %207 = vrot.lane.b32.xlu0 %v195, 64
        %v208 = vpop.permute.xlu0 %207
        %209 = vrot.lane.b32.xlu0 %v196, 64
        %v210 = vpop.permute.xlu0 %209
        %211 = vrot.lane.b32.xlu0 %v197, 64
        %v212 = vpop.permute.xlu0 %211
        %213 = vrot.lane.b32.xlu0 %v198, 64
        %v214 = vpop.permute.xlu0 %213
        %vm215 = vcmask 523264
        %v216 = vsel %vm215, %v200, %v202
        %v217 = vsel %vm215, %v202, %v204
        %v218 = vsel %vm215, %v204, %v206
        %v219 = vsel %vm215, %v206, %v208
        %v220 = vsel %vm215, %v208, %v210
        %v221 = vsel %vm215, %v210, %v212
        %v222 = vsel %vm215, %v212, %v214
        %vm223 = vcmask 31744
        %v225 = vsel %vm223, %v179, 0
        %vm227 = vcmask 1043456
        %v228 = vsel %vm227, %v216, 0
        %v230 = vsel %vm227, %v217, 0
        %v232 = vsel %vm227, %v218, 0
        %v234 = vsel %vm227, %v219, 0
        %v236 = vsel %vm227, %v220, 0
        %v238 = vsel %vm227, %v221, 0
        %v240 = vsel %vm227, %v222, 0
        %242 = vmatpush.msra.mxu0 0.0
        %243 = vmatpush.msra.mxu0 0.0
        %244 = vmatpush.msra.mxu0 0.0
        %245 = vmatpush.msra.mxu0 0.0
        %246 = vmatpush.msra.mxu0 0.0
        %247 = vmatpush.msra.mxu0 0.0
        %248 = vmatpush.msra.mxu0 0.0
        %249 = vmatpush.msra.mxu0 0.0
        %250 = vmatpush.msra.mxu0 0.0
        %251 = vmatpush.msra.mxu0 0.0
        %252 = vmatpush.msra.mxu0 0.0
        %253 = vmatpush.msra.mxu0 0.0
        %254 = vmatpush.msra.mxu0 0.0
        %255 = vmatpush.msra.mxu0 0.0
        %256 = vmatpush.msra.mxu0 0.0
        %257 = vmatpush.msra.mxu0 %v228
        %258 = vmatmul.f32.gmra.mxu0 %v225
        %v259 = vpop.f32.mrf.mxu0
        %v260 = vadd.f32 0.0, %v259
        %261 = vdwg.mxu0
        %262 = vmatpush.msra.mxu0 0.0
        %263 = vmatpush.msra.mxu0 0.0
        %264 = vmatpush.msra.mxu0 0.0
        %265 = vmatpush.msra.mxu0 0.0
        %266 = vmatpush.msra.mxu0 0.0
        %267 = vmatpush.msra.mxu0 0.0
        %268 = vmatpush.msra.mxu0 0.0
        %269 = vmatpush.msra.mxu0 0.0
        %270 = vmatpush.msra.mxu0 0.0
        %271 = vmatpush.msra.mxu0 0.0
        %272 = vmatpush.msra.mxu0 0.0
        %273 = vmatpush.msra.mxu0 0.0
        %274 = vmatpush.msra.mxu0 0.0
        %275 = vmatpush.msra.mxu0 0.0
        %276 = vmatpush.msra.mxu0 0.0
        %277 = vmatpush.msra.mxu0 %v230
        %278 = vmatmul.f32.gmra.mxu0 %v225
        %v279 = vpop.f32.mrf.mxu0
        %v280 = vadd.f32 0.0, %v279
        %281 = vdwg.mxu0
        %282 = vmatpush.msra.mxu0 0.0
        %283 = vmatpush.msra.mxu0 0.0
        %284 = vmatpush.msra.mxu0 0.0
        %285 = vmatpush.msra.mxu0 0.0
        %286 = vmatpush.msra.mxu0 0.0
        %287 = vmatpush.msra.mxu0 0.0
        %288 = vmatpush.msra.mxu0 0.0
        %289 = vmatpush.msra.mxu0 0.0
        %290 = vmatpush.msra.mxu0 0.0
        %291 = vmatpush.msra.mxu0 0.0
        %292 = vmatpush.msra.mxu0 0.0
        %293 = vmatpush.msra.mxu0 0.0
        %294 = vmatpush.msra.mxu0 0.0
        %295 = vmatpush.msra.mxu0 0.0
        %296 = vmatpush.msra.mxu0 0.0
        %297 = vmatpush.msra.mxu0 %v232
        %298 = vmatmul.f32.gmra.mxu0 %v225
        %v299 = vpop.f32.mrf.mxu0
        %v300 = vadd.f32 0.0, %v299
        %301 = vdwg.mxu0
        %302 = vmatpush.msra.mxu0 0.0
        %303 = vmatpush.msra.mxu0 0.0
        %304 = vmatpush.msra.mxu0 0.0
        %305 = vmatpush.msra.mxu0 0.0
        %306 = vmatpush.msra.mxu0 0.0
        %307 = vmatpush.msra.mxu0 0.0
        %308 = vmatpush.msra.mxu0 0.0
        %309 = vmatpush.msra.mxu0 0.0
        %310 = vmatpush.msra.mxu0 0.0
        %311 = vmatpush.msra.mxu0 0.0
        %312 = vmatpush.msra.mxu0 0.0
        %313 = vmatpush.msra.mxu0 0.0
        %314 = vmatpush.msra.mxu0 0.0
        %315 = vmatpush.msra.mxu0 0.0
        %316 = vmatpush.msra.mxu0 0.0
        %317 = vmatpush.msra.mxu0 %v234
        %318 = vmatmul.f32.gmra.mxu0 %v225
        %v319 = vpop.f32.mrf.mxu0
        %v320 = vadd.f32 0.0, %v319
        %321 = vdwg.mxu0
        %322 = vmatpush.msra.mxu0 0.0
        %323 = vmatpush.msra.mxu0 0.0
        %324 = vmatpush.msra.mxu0 0.0
        %325 = vmatpush.msra.mxu0 0.0
        %326 = vmatpush.msra.mxu0 0.0
        %327 = vmatpush.msra.mxu0 0.0
        %328 = vmatpush.msra.mxu0 0.0
        %329 = vmatpush.msra.mxu0 0.0
        %330 = vmatpush.msra.mxu0 0.0
        %331 = vmatpush.msra.mxu0 0.0
        %332 = vmatpush.msra.mxu0 0.0
        %333 = vmatpush.msra.mxu0 0.0
        %334 = vmatpush.msra.mxu0 0.0
        %335 = vmatpush.msra.mxu0 0.0
        %336 = vmatpush.msra.mxu0 0.0
        %337 = vmatpush.msra.mxu0 %v236
        %338 = vmatmul.f32.gmra.mxu0 %v225
        %v339 = vpop.f32.mrf.mxu0
        %v340 = vadd.f32 0.0, %v339
        %341 = vdwg.mxu0
        %342 = vmatpush.msra.mxu0 0.0
        %343 = vmatpush.msra.mxu0 0.0
        %344 = vmatpush.msra.mxu0 0.0
        %345 = vmatpush.msra.mxu0 0.0
        %346 = vmatpush.msra.mxu0 0.0
        %347 = vmatpush.msra.mxu0 0.0
        %348 = vmatpush.msra.mxu0 0.0
        %349 = vmatpush.msra.mxu0 0.0
        %350 = vmatpush.msra.mxu0 0.0
        %351 = vmatpush.msra.mxu0 0.0
        %352 = vmatpush.msra.mxu0 0.0
        %353 = vmatpush.msra.mxu0 0.0
        %354 = vmatpush.msra.mxu0 0.0
        %355 = vmatpush.msra.mxu0 0.0
        %356 = vmatpush.msra.mxu0 0.0
        %357 = vmatpush.msra.mxu0 %v238
        %358 = vmatmul.f32.gmra.mxu0 %v225
        %v359 = vpop.f32.mrf.mxu0
        %v360 = vadd.f32 0.0, %v359
        %361 = vdwg.mxu0
        %362 = vmatpush.msra.mxu0 0.0
        %363 = vmatpush.msra.mxu0 0.0
        %364 = vmatpush.msra.mxu0 0.0
        %365 = vmatpush.msra.mxu0 0.0
        %366 = vmatpush.msra.mxu0 0.0
        %367 = vmatpush.msra.mxu0 0.0
        %368 = vmatpush.msra.mxu0 0.0
        %369 = vmatpush.msra.mxu0 0.0
        %370 = vmatpush.msra.mxu0 0.0
        %371 = vmatpush.msra.mxu0 0.0
        %372 = vmatpush.msra.mxu0 0.0
        %373 = vmatpush.msra.mxu0 0.0
        %374 = vmatpush.msra.mxu0 0.0
        %375 = vmatpush.msra.mxu0 0.0
        %376 = vmatpush.msra.mxu0 0.0
        %377 = vmatpush.msra.mxu0 %v240
        %378 = vmatmul.f32.gmra.mxu0 %v225
        %v379 = vpop.f32.mrf.mxu0
        %v380 = vadd.f32 0.0, %v379
        %381 = vdwg.mxu0
        %386 = vst [vmem:[#allocation1] ss:$2 sm:$0xff] %v169
        %s387 = scalar_lea.vmem [#allocation1], 16
        %388 = vst [vmem:[%s387] ss:$2 sm:$0xff] %v170
        %s389 = scalar_lea.vmem [#allocation1], 32
        %390 = vst [vmem:[%s389] ss:$2 sm:$0xff] %v171
        %s391 = scalar_lea.vmem [#allocation1], 48
        %392 = vst [vmem:[%s391] ss:$2 sm:$0xff] %v172
        %v393 = vld.sshfl [vmem:[#allocation1] sm:$0xff pattern:$0x75316420]
        %v394 = vld.sshfl [vmem:[#allocation1 + $0x8] sm:$0xff pattern:$0x75316420]
        %v395 = vld.sshfl [vmem:[#allocation1 + $0x10] sm:$0xff pattern:$0x75316420]
        %v396 = vld.sshfl [vmem:[#allocation1 + $0x18] sm:$0xff pattern:$0x75316420]
        %v397 = vld.sshfl [vmem:[#allocation1 + $0x20] sm:$0xff pattern:$0x75316420]
        %v398 = vld.sshfl [vmem:[#allocation1 + $0x28] sm:$0xff pattern:$0x75316420]
        %v399 = vld.sshfl [vmem:[#allocation1 + $0x30] sm:$0xff pattern:$0x75316420]
        %v401 = vsel %vm223, %v173, 0
        %v403 = vsel %vm227, %v393, 0
        %v405 = vsel %vm227, %v394, 0
        %v407 = vsel %vm227, %v395, 0
        %v409 = vsel %vm227, %v396, 0
        %v411 = vsel %vm227, %v397, 0
        %v413 = vsel %vm227, %v398, 0
        %v415 = vsel %vm227, %v399, 0
        %417 = vmatpush.msra.mxu0 0.0
        %418 = vmatpush.msra.mxu0 0.0
        %419 = vmatpush.msra.mxu0 0.0
        %420 = vmatpush.msra.mxu0 0.0
        %421 = vmatpush.msra.mxu0 0.0
        %422 = vmatpush.msra.mxu0 0.0
        %423 = vmatpush.msra.mxu0 0.0
        %424 = vmatpush.msra.mxu0 0.0
        %425 = vmatpush.msra.mxu0 0.0
        %426 = vmatpush.msra.mxu0 0.0
        %427 = vmatpush.msra.mxu0 0.0
        %428 = vmatpush.msra.mxu0 0.0
        %429 = vmatpush.msra.mxu0 0.0
        %430 = vmatpush.msra.mxu0 0.0
        %431 = vmatpush.msra.mxu0 0.0
        %432 = vmatpush.msra.mxu0 %v403
        %433 = vmatmul.f32.gmra.mxu0 %v401
        %v434 = vpop.f32.mrf.mxu0
        %v435 = vadd.f32 %v260, %v434
        %436 = vdwg.mxu0
        %437 = vmatpush.msra.mxu0 0.0
        %438 = vmatpush.msra.mxu0 0.0
        %439 = vmatpush.msra.mxu0 0.0
        %440 = vmatpush.msra.mxu0 0.0
        %441 = vmatpush.msra.mxu0 0.0
        %442 = vmatpush.msra.mxu0 0.0
        %443 = vmatpush.msra.mxu0 0.0
        %444 = vmatpush.msra.mxu0 0.0
        %445 = vmatpush.msra.mxu0 0.0
        %446 = vmatpush.msra.mxu0 0.0
        %447 = vmatpush.msra.mxu0 0.0
        %448 = vmatpush.msra.mxu0 0.0
        %449 = vmatpush.msra.mxu0 0.0
        %450 = vmatpush.msra.mxu0 0.0
        %451 = vmatpush.msra.mxu0 0.0
        %452 = vmatpush.msra.mxu0 %v405
        %453 = vmatmul.f32.gmra.mxu0 %v401
        %v454 = vpop.f32.mrf.mxu0
        %v455 = vadd.f32 %v280, %v454
        %456 = vdwg.mxu0
        %457 = vmatpush.msra.mxu0 0.0
        %458 = vmatpush.msra.mxu0 0.0
        %459 = vmatpush.msra.mxu0 0.0
        %460 = vmatpush.msra.mxu0 0.0
        %461 = vmatpush.msra.mxu0 0.0
        %462 = vmatpush.msra.mxu0 0.0
        %463 = vmatpush.msra.mxu0 0.0
        %464 = vmatpush.msra.mxu0 0.0
        %465 = vmatpush.msra.mxu0 0.0
        %466 = vmatpush.msra.mxu0 0.0
        %467 = vmatpush.msra.mxu0 0.0
        %468 = vmatpush.msra.mxu0 0.0
        %469 = vmatpush.msra.mxu0 0.0
        %470 = vmatpush.msra.mxu0 0.0
        %471 = vmatpush.msra.mxu0 0.0
        %472 = vmatpush.msra.mxu0 %v407
        %473 = vmatmul.f32.gmra.mxu0 %v401
        %v474 = vpop.f32.mrf.mxu0
        %v475 = vadd.f32 %v300, %v474
        %476 = vdwg.mxu0
        %477 = vmatpush.msra.mxu0 0.0
        %478 = vmatpush.msra.mxu0 0.0
        %479 = vmatpush.msra.mxu0 0.0
        %480 = vmatpush.msra.mxu0 0.0
        %481 = vmatpush.msra.mxu0 0.0
        %482 = vmatpush.msra.mxu0 0.0
        %483 = vmatpush.msra.mxu0 0.0
        %484 = vmatpush.msra.mxu0 0.0
        %485 = vmatpush.msra.mxu0 0.0
        %486 = vmatpush.msra.mxu0 0.0
        %487 = vmatpush.msra.mxu0 0.0
        %488 = vmatpush.msra.mxu0 0.0
        %489 = vmatpush.msra.mxu0 0.0
        %490 = vmatpush.msra.mxu0 0.0
        %491 = vmatpush.msra.mxu0 0.0
        %492 = vmatpush.msra.mxu0 %v409
        %493 = vmatmul.f32.gmra.mxu0 %v401
        %v494 = vpop.f32.mrf.mxu0
        %v495 = vadd.f32 %v320, %v494
        %496 = vdwg.mxu0
        %497 = vmatpush.msra.mxu0 0.0
        %498 = vmatpush.msra.mxu0 0.0
        %499 = vmatpush.msra.mxu0 0.0
        %500 = vmatpush.msra.mxu0 0.0
        %501 = vmatpush.msra.mxu0 0.0
        %502 = vmatpush.msra.mxu0 0.0
        %503 = vmatpush.msra.mxu0 0.0
        %504 = vmatpush.msra.mxu0 0.0
        %505 = vmatpush.msra.mxu0 0.0
        %506 = vmatpush.msra.mxu0 0.0
        %507 = vmatpush.msra.mxu0 0.0
        %508 = vmatpush.msra.mxu0 0.0
        %509 = vmatpush.msra.mxu0 0.0
        %510 = vmatpush.msra.mxu0 0.0
        %511 = vmatpush.msra.mxu0 0.0
        %512 = vmatpush.msra.mxu0 %v411
        %513 = vmatmul.f32.gmra.mxu0 %v401
        %v514 = vpop.f32.mrf.mxu0
        %v515 = vadd.f32 %v340, %v514
        %516 = vdwg.mxu0
        %517 = vmatpush.msra.mxu0 0.0
        %518 = vmatpush.msra.mxu0 0.0
        %519 = vmatpush.msra.mxu0 0.0
        %520 = vmatpush.msra.mxu0 0.0
        %521 = vmatpush.msra.mxu0 0.0
        %522 = vmatpush.msra.mxu0 0.0
        %523 = vmatpush.msra.mxu0 0.0
        %524 = vmatpush.msra.mxu0 0.0
        %525 = vmatpush.msra.mxu0 0.0
        %526 = vmatpush.msra.mxu0 0.0
        %527 = vmatpush.msra.mxu0 0.0
        %528 = vmatpush.msra.mxu0 0.0
        %529 = vmatpush.msra.mxu0 0.0
        %530 = vmatpush.msra.mxu0 0.0
        %531 = vmatpush.msra.mxu0 0.0
        %532 = vmatpush.msra.mxu0 %v413
        %533 = vmatmul.f32.gmra.mxu0 %v401
        %v534 = vpop.f32.mrf.mxu0
        %v535 = vadd.f32 %v360, %v534
        %536 = vdwg.mxu0
        %537 = vmatpush.msra.mxu0 0.0
        %538 = vmatpush.msra.mxu0 0.0
        %539 = vmatpush.msra.mxu0 0.0
        %540 = vmatpush.msra.mxu0 0.0
        %541 = vmatpush.msra.mxu0 0.0
        %542 = vmatpush.msra.mxu0 0.0
        %543 = vmatpush.msra.mxu0 0.0
        %544 = vmatpush.msra.mxu0 0.0
        %545 = vmatpush.msra.mxu0 0.0
        %546 = vmatpush.msra.mxu0 0.0
        %547 = vmatpush.msra.mxu0 0.0
        %548 = vmatpush.msra.mxu0 0.0
        %549 = vmatpush.msra.mxu0 0.0
        %550 = vmatpush.msra.mxu0 0.0
        %551 = vmatpush.msra.mxu0 0.0
        %552 = vmatpush.msra.mxu0 %v415
        %553 = vmatmul.f32.gmra.mxu0 %v401
        %v554 = vpop.f32.mrf.mxu0
        %v555 = vadd.f32 %v380, %v554
        %556 = vdwg.mxu0
        %v557 = vld [vmem:[%s168 + $0x4] sm:$0xff]
        %v558 = vld [vmem:[%s168 + $0xc] sm:$0xff]
        %v559 = vld [vmem:[%s168 + $0x14] sm:$0xff]
        %v560 = vld [vmem:[%s168 + $0x1c] sm:$0xf]
        %s561 = scalar_lea.vmem %s1, 16
        %v562 = vld [vmem:[%s561] sm:$0xff]
        %567 = vst [vmem:[#allocation1] ss:$2 sm:$0xff] %v557
        %s568 = scalar_lea.vmem [#allocation1], 16
        %569 = vst [vmem:[%s568] ss:$2 sm:$0xff] %v558
        %s570 = scalar_lea.vmem [#allocation1], 32
        %571 = vst [vmem:[%s570] ss:$2 sm:$0xff] %v559
        %s572 = scalar_lea.vmem [#allocation1], 48
        %573 = vst [vmem:[%s572] ss:$2 sm:$0xff] %v560
        %v574 = vld.sshfl [vmem:[#allocation1] sm:$0xff pattern:$0x75316420]
        %v575 = vld.sshfl [vmem:[#allocation1 + $0x8] sm:$0xff pattern:$0x75316420]
        %v576 = vld.sshfl [vmem:[#allocation1 + $0x10] sm:$0xff pattern:$0x75316420]
        %v577 = vld.sshfl [vmem:[#allocation1 + $0x18] sm:$0xff pattern:$0x75316420]
        %v578 = vld.sshfl [vmem:[#allocation1 + $0x20] sm:$0xff pattern:$0x75316420]
        %v579 = vld.sshfl [vmem:[#allocation1 + $0x28] sm:$0xff pattern:$0x75316420]
        %v580 = vld.sshfl [vmem:[#allocation1 + $0x30] sm:$0xff pattern:$0x75316420]
        %v582 = vsel %vm223, %v562, 0
        %v584 = vsel %vm227, %v574, 0
        %v586 = vsel %vm227, %v575, 0
        %v588 = vsel %vm227, %v576, 0
        %v590 = vsel %vm227, %v577, 0
        %v592 = vsel %vm227, %v578, 0
        %v594 = vsel %vm227, %v579, 0
        %v596 = vsel %vm227, %v580, 0
        %598 = vmatpush.msra.mxu0 0.0
        %599 = vmatpush.msra.mxu0 0.0
        %600 = vmatpush.msra.mxu0 0.0
        %601 = vmatpush.msra.mxu0 0.0
        %602 = vmatpush.msra.mxu0 0.0
        %603 = vmatpush.msra.mxu0 0.0
        %604 = vmatpush.msra.mxu0 0.0
        %605 = vmatpush.msra.mxu0 0.0
        %606 = vmatpush.msra.mxu0 0.0
        %607 = vmatpush.msra.mxu0 0.0
        %608 = vmatpush.msra.mxu0 0.0
        %609 = vmatpush.msra.mxu0 0.0
        %610 = vmatpush.msra.mxu0 0.0
        %611 = vmatpush.msra.mxu0 0.0
        %612 = vmatpush.msra.mxu0 0.0
        %613 = vmatpush.msra.mxu0 %v584
        %614 = vmatmul.f32.gmra.mxu0 %v582
        %v615 = vpop.f32.mrf.mxu0
        %v616 = vadd.f32 0.0, %v615
        %617 = vdwg.mxu0
        %618 = vmatpush.msra.mxu0 0.0
        %619 = vmatpush.msra.mxu0 0.0
        %620 = vmatpush.msra.mxu0 0.0
        %621 = vmatpush.msra.mxu0 0.0
        %622 = vmatpush.msra.mxu0 0.0
        %623 = vmatpush.msra.mxu0 0.0
        %624 = vmatpush.msra.mxu0 0.0
        %625 = vmatpush.msra.mxu0 0.0
        %626 = vmatpush.msra.mxu0 0.0
        %627 = vmatpush.msra.mxu0 0.0
        %628 = vmatpush.msra.mxu0 0.0
        %629 = vmatpush.msra.mxu0 0.0
        %630 = vmatpush.msra.mxu0 0.0
        %631 = vmatpush.msra.mxu0 0.0
        %632 = vmatpush.msra.mxu0 0.0
        %633 = vmatpush.msra.mxu0 %v586
        %634 = vmatmul.f32.gmra.mxu0 %v582
        %v635 = vpop.f32.mrf.mxu0
        %v636 = vadd.f32 0.0, %v635
        %637 = vdwg.mxu0
        %638 = vmatpush.msra.mxu0 0.0
        %639 = vmatpush.msra.mxu0 0.0
        %640 = vmatpush.msra.mxu0 0.0
        %641 = vmatpush.msra.mxu0 0.0
        %642 = vmatpush.msra.mxu0 0.0
        %643 = vmatpush.msra.mxu0 0.0
        %644 = vmatpush.msra.mxu0 0.0
        %645 = vmatpush.msra.mxu0 0.0
        %646 = vmatpush.msra.mxu0 0.0
        %647 = vmatpush.msra.mxu0 0.0
        %648 = vmatpush.msra.mxu0 0.0
        %649 = vmatpush.msra.mxu0 0.0
        %650 = vmatpush.msra.mxu0 0.0
        %651 = vmatpush.msra.mxu0 0.0
        %652 = vmatpush.msra.mxu0 0.0
        %653 = vmatpush.msra.mxu0 %v588
        %654 = vmatmul.f32.gmra.mxu0 %v582
        %v655 = vpop.f32.mrf.mxu0
        %v656 = vadd.f32 0.0, %v655
        %657 = vdwg.mxu0
        %658 = vmatpush.msra.mxu0 0.0
        %659 = vmatpush.msra.mxu0 0.0
        %660 = vmatpush.msra.mxu0 0.0
        %661 = vmatpush.msra.mxu0 0.0
        %662 = vmatpush.msra.mxu0 0.0
        %663 = vmatpush.msra.mxu0 0.0
        %664 = vmatpush.msra.mxu0 0.0
        %665 = vmatpush.msra.mxu0 0.0
        %666 = vmatpush.msra.mxu0 0.0
        %667 = vmatpush.msra.mxu0 0.0
        %668 = vmatpush.msra.mxu0 0.0
        %669 = vmatpush.msra.mxu0 0.0
        %670 = vmatpush.msra.mxu0 0.0
        %671 = vmatpush.msra.mxu0 0.0
        %672 = vmatpush.msra.mxu0 0.0
        %673 = vmatpush.msra.mxu0 %v590
        %674 = vmatmul.f32.gmra.mxu0 %v582
        %v675 = vpop.f32.mrf.mxu0
        %v676 = vadd.f32 0.0, %v675
        %677 = vdwg.mxu0
        %678 = vmatpush.msra.mxu0 0.0
        %679 = vmatpush.msra.mxu0 0.0
        %680 = vmatpush.msra.mxu0 0.0
        %681 = vmatpush.msra.mxu0 0.0
        %682 = vmatpush.msra.mxu0 0.0
        %683 = vmatpush.msra.mxu0 0.0
        %684 = vmatpush.msra.mxu0 0.0
        %685 = vmatpush.msra.mxu0 0.0
        %686 = vmatpush.msra.mxu0 0.0
        %687 = vmatpush.msra.mxu0 0.0
        %688 = vmatpush.msra.mxu0 0.0
        %689 = vmatpush.msra.mxu0 0.0
        %690 = vmatpush.msra.mxu0 0.0
        %691 = vmatpush.msra.mxu0 0.0
        %692 = vmatpush.msra.mxu0 0.0
        %693 = vmatpush.msra.mxu0 %v592
        %694 = vmatmul.f32.gmra.mxu0 %v582
        %v695 = vpop.f32.mrf.mxu0
        %v696 = vadd.f32 0.0, %v695
        %697 = vdwg.mxu0
        %698 = vmatpush.msra.mxu0 0.0
        %699 = vmatpush.msra.mxu0 0.0
        %700 = vmatpush.msra.mxu0 0.0
        %701 = vmatpush.msra.mxu0 0.0
        %702 = vmatpush.msra.mxu0 0.0
        %703 = vmatpush.msra.mxu0 0.0
        %704 = vmatpush.msra.mxu0 0.0
        %705 = vmatpush.msra.mxu0 0.0
        %706 = vmatpush.msra.mxu0 0.0
        %707 = vmatpush.msra.mxu0 0.0
        %708 = vmatpush.msra.mxu0 0.0
        %709 = vmatpush.msra.mxu0 0.0
        %710 = vmatpush.msra.mxu0 0.0
        %711 = vmatpush.msra.mxu0 0.0
        %712 = vmatpush.msra.mxu0 0.0
        %713 = vmatpush.msra.mxu0 %v594
        %714 = vmatmul.f32.gmra.mxu0 %v582
        %v715 = vpop.f32.mrf.mxu0
        %v716 = vadd.f32 0.0, %v715
        %717 = vdwg.mxu0
        %718 = vmatpush.msra.mxu0 0.0
        %719 = vmatpush.msra.mxu0 0.0
        %720 = vmatpush.msra.mxu0 0.0
        %721 = vmatpush.msra.mxu0 0.0
        %722 = vmatpush.msra.mxu0 0.0
        %723 = vmatpush.msra.mxu0 0.0
        %724 = vmatpush.msra.mxu0 0.0
        %725 = vmatpush.msra.mxu0 0.0
        %726 = vmatpush.msra.mxu0 0.0
        %727 = vmatpush.msra.mxu0 0.0
        %728 = vmatpush.msra.mxu0 0.0
        %729 = vmatpush.msra.mxu0 0.0
        %730 = vmatpush.msra.mxu0 0.0
        %731 = vmatpush.msra.mxu0 0.0
        %732 = vmatpush.msra.mxu0 0.0
        %733 = vmatpush.msra.mxu0 %v596
        %734 = vmatmul.f32.gmra.mxu0 %v582
        %v735 = vpop.f32.mrf.mxu0
        %v736 = vadd.f32 0.0, %v735
        %737 = vdwg.mxu0
        %v738 = vadd.f32 %v435, %v616
        %v739 = vadd.f32 %v455, %v636
        %v740 = vadd.f32 %v475, %v656
        %v741 = vadd.f32 %v495, %v676
        %v742 = vadd.f32 %v515, %v696
        %v743 = vadd.f32 %v535, %v716
        %v744 = vadd.f32 %v555, %v736
        %v745 = vld [vmem:[%s2] sm:$0xff]
        %747 = vset.pattern.permute.xlu0 0
        %748 = vperm.xlu0 %747, %v745
        %v749 = vpop.permute.xlu0 %748
        %v751 = vadd.f32 %v738, %v749
        %v752 = vadd.f32 %v739, %v749
        %v753 = vadd.f32 %v740, %v749
        %v754 = vadd.f32 %v741, %v749
        %v755 = vadd.f32 %v742, %v749
        %v756 = vadd.f32 %v743, %v749
        %v757 = vadd.f32 %v744, %v749
        %v758 = vmax.f32 %v751, 0.0
        %v759 = vmax.f32 %v752, 0.0
        %v760 = vmax.f32 %v753, 0.0
        %v761 = vmax.f32 %v754, 0.0
        %v762 = vmax.f32 %v755, 0.0
        %v763 = vmax.f32 %v756, 0.0
        %v764 = vmax.f32 %v757, 0.0
        %765 = vst [vmem:[%s163] sm:$0xff] %v758
        %766 = vst [vmem:[%s163 + $0x8] sm:$0xff] %v759
        %767 = vst [vmem:[%s163 + $0x10] sm:$0xff] %v760
        %768 = vst [vmem:[%s163 + $0x18] sm:$0xff] %v761
        %769 = vst [vmem:[%s163 + $0x20] sm:$0xff] %v762
        %770 = vst [vmem:[%s163 + $0x28] sm:$0xff] %v763
        %771 = vst [vmem:[%s163 + $0x30] sm:$0xff] %v764
        %v772 = vld [vmem:[%s168] sm:$0xff]
        %v773 = vld [vmem:[%s168 + $0x8] sm:$0xff]
        %v774 = vld [vmem:[%s168 + $0x10] sm:$0xff]
        %s775 = scalar_lea.vmem %s1, 24
        %v776 = vld [vmem:[%s775] sm:$0xff]
        %v777 = vld [vmem:[%s168 + $0x4] sm:$0xff]
        %v778 = vld [vmem:[%s168 + $0xc] sm:$0xff]
        %v779 = vld [vmem:[%s168 + $0x14] sm:$0xff]
        %s780 = scalar_lea.vmem %s1, 32
        %v781 = vld [vmem:[%s780] sm:$0xff]
        %785 = vst [vmem:[#allocation1] ss:$2 sm:$0xff] %v777
        %s786 = scalar_lea.vmem [#allocation1], 16
        %787 = vst [vmem:[%s786] ss:$2 sm:$0xff] %v778
        %s788 = scalar_lea.vmem [#allocation1], 32
        %789 = vst [vmem:[%s788] ss:$2 sm:$0xff] %v779
        %v790 = vld.sshfl [vmem:[#allocation1] sm:$0xff pattern:$0x75316420]
        %v791 = vld.sshfl [vmem:[#allocation1 + $0x8] sm:$0xff pattern:$0x75316420]
        %v792 = vld.sshfl [vmem:[#allocation1 + $0x10] sm:$0xff pattern:$0x75316420]
        %v793 = vld.sshfl [vmem:[#allocation1 + $0x18] sm:$0xff pattern:$0x75316420]
        %v794 = vld.sshfl [vmem:[#allocation1 + $0x20] sm:$0xff pattern:$0x75316420]
        %v795 = vld.sshfl [vmem:[#allocation1 + $0x28] sm:$0xff pattern:$0x75316420]
        %v797 = vsel %vm223, %v781, 0
        %v799 = vsel %vm227, %v790, 0
        %v801 = vsel %vm227, %v791, 0
        %v803 = vsel %vm227, %v792, 0
        %v805 = vsel %vm227, %v793, 0
        %v807 = vsel %vm227, %v794, 0
        %v809 = vsel %vm227, %v795, 0
        %811 = vmatpush.msra.mxu0 0.0
        %812 = vmatpush.msra.mxu0 0.0
        %813 = vmatpush.msra.mxu0 0.0
        %814 = vmatpush.msra.mxu0 0.0
        %815 = vmatpush.msra.mxu0 0.0
        %816 = vmatpush.msra.mxu0 0.0
        %817 = vmatpush.msra.mxu0 0.0
        %818 = vmatpush.msra.mxu0 0.0
        %819 = vmatpush.msra.mxu0 0.0
        %820 = vmatpush.msra.mxu0 0.0
        %821 = vmatpush.msra.mxu0 0.0
        %822 = vmatpush.msra.mxu0 0.0
        %823 = vmatpush.msra.mxu0 0.0
        %824 = vmatpush.msra.mxu0 0.0
        %825 = vmatpush.msra.mxu0 0.0
        %826 = vmatpush.msra.mxu0 %v799
        %827 = vmatmul.f32.gmra.mxu0 %v797
        %v828 = vpop.f32.mrf.mxu0
        %v829 = vadd.f32 0.0, %v828
        %830 = vdwg.mxu0
        %831 = vmatpush.msra.mxu0 0.0
        %832 = vmatpush.msra.mxu0 0.0
        %833 = vmatpush.msra.mxu0 0.0
        %834 = vmatpush.msra.mxu0 0.0
        %835 = vmatpush.msra.mxu0 0.0
        %836 = vmatpush.msra.mxu0 0.0
        %837 = vmatpush.msra.mxu0 0.0
        %838 = vmatpush.msra.mxu0 0.0
        %839 = vmatpush.msra.mxu0 0.0
        %840 = vmatpush.msra.mxu0 0.0
        %841 = vmatpush.msra.mxu0 0.0
        %842 = vmatpush.msra.mxu0 0.0
        %843 = vmatpush.msra.mxu0 0.0
        %844 = vmatpush.msra.mxu0 0.0
        %845 = vmatpush.msra.mxu0 0.0
        %846 = vmatpush.msra.mxu0 %v801
        %847 = vmatmul.f32.gmra.mxu0 %v797
        %v848 = vpop.f32.mrf.mxu0
        %v849 = vadd.f32 0.0, %v848
        %850 = vdwg.mxu0
        %851 = vmatpush.msra.mxu0 0.0
        %852 = vmatpush.msra.mxu0 0.0
        %853 = vmatpush.msra.mxu0 0.0
        %854 = vmatpush.msra.mxu0 0.0
        %855 = vmatpush.msra.mxu0 0.0
        %856 = vmatpush.msra.mxu0 0.0
        %857 = vmatpush.msra.mxu0 0.0
        %858 = vmatpush.msra.mxu0 0.0
        %859 = vmatpush.msra.mxu0 0.0
        %860 = vmatpush.msra.mxu0 0.0
        %861 = vmatpush.msra.mxu0 0.0
        %862 = vmatpush.msra.mxu0 0.0
        %863 = vmatpush.msra.mxu0 0.0
        %864 = vmatpush.msra.mxu0 0.0
        %865 = vmatpush.msra.mxu0 0.0
        %866 = vmatpush.msra.mxu0 %v803
        %867 = vmatmul.f32.gmra.mxu0 %v797
        %v868 = vpop.f32.mrf.mxu0
        %v869 = vadd.f32 0.0, %v868
        %870 = vdwg.mxu0
        %871 = vmatpush.msra.mxu0 0.0
        %872 = vmatpush.msra.mxu0 0.0
        %873 = vmatpush.msra.mxu0 0.0
        %874 = vmatpush.msra.mxu0 0.0
        %875 = vmatpush.msra.mxu0 0.0
        %876 = vmatpush.msra.mxu0 0.0
        %877 = vmatpush.msra.mxu0 0.0
        %878 = vmatpush.msra.mxu0 0.0
        %879 = vmatpush.msra.mxu0 0.0
        %880 = vmatpush.msra.mxu0 0.0
        %881 = vmatpush.msra.mxu0 0.0
        %882 = vmatpush.msra.mxu0 0.0
        %883 = vmatpush.msra.mxu0 0.0
        %884 = vmatpush.msra.mxu0 0.0
        %885 = vmatpush.msra.mxu0 0.0
        %886 = vmatpush.msra.mxu0 %v805
        %887 = vmatmul.f32.gmra.mxu0 %v797
        %v888 = vpop.f32.mrf.mxu0
        %v889 = vadd.f32 0.0, %v888
        %890 = vdwg.mxu0
        %891 = vmatpush.msra.mxu0 0.0
        %892 = vmatpush.msra.mxu0 0.0
        %893 = vmatpush.msra.mxu0 0.0
        %894 = vmatpush.msra.mxu0 0.0
        %895 = vmatpush.msra.mxu0 0.0
        %896 = vmatpush.msra.mxu0 0.0
        %897 = vmatpush.msra.mxu0 0.0
        %898 = vmatpush.msra.mxu0 0.0
        %899 = vmatpush.msra.mxu0 0.0
        %900 = vmatpush.msra.mxu0 0.0
        %901 = vmatpush.msra.mxu0 0.0
        %902 = vmatpush.msra.mxu0 0.0
        %903 = vmatpush.msra.mxu0 0.0
        %904 = vmatpush.msra.mxu0 0.0
        %905 = vmatpush.msra.mxu0 0.0
        %906 = vmatpush.msra.mxu0 %v807
        %907 = vmatmul.f32.gmra.mxu0 %v797
        %v908 = vpop.f32.mrf.mxu0
        %v909 = vadd.f32 0.0, %v908
        %910 = vdwg.mxu0
        %911 = vmatpush.msra.mxu0 0.0
        %912 = vmatpush.msra.mxu0 0.0
        %913 = vmatpush.msra.mxu0 0.0
        %914 = vmatpush.msra.mxu0 0.0
        %915 = vmatpush.msra.mxu0 0.0
        %916 = vmatpush.msra.mxu0 0.0
        %917 = vmatpush.msra.mxu0 0.0
        %918 = vmatpush.msra.mxu0 0.0
        %919 = vmatpush.msra.mxu0 0.0
        %920 = vmatpush.msra.mxu0 0.0
        %921 = vmatpush.msra.mxu0 0.0
        %922 = vmatpush.msra.mxu0 0.0
        %923 = vmatpush.msra.mxu0 0.0
        %924 = vmatpush.msra.mxu0 0.0
        %925 = vmatpush.msra.mxu0 0.0
        %926 = vmatpush.msra.mxu0 %v809
        %927 = vmatmul.f32.gmra.mxu0 %v797
        %v928 = vpop.f32.mrf.mxu0
        %v929 = vadd.f32 0.0, %v928
        %930 = vdwg.mxu0
        %934 = vst [vmem:[#allocation1] ss:$2 sm:$0xff] %v772
        %s935 = scalar_lea.vmem [#allocation1], 16
        %936 = vst [vmem:[%s935] ss:$2 sm:$0xff] %v773
        %s937 = scalar_lea.vmem [#allocation1], 32
        %938 = vst [vmem:[%s937] ss:$2 sm:$0xff] %v774
        %v939 = vld.sshfl [vmem:[#allocation1] sm:$0xff pattern:$0x75316420]
        %v940 = vld.sshfl [vmem:[#allocation1 + $0x8] sm:$0xff pattern:$0x75316420]
        %v941 = vld.sshfl [vmem:[#allocation1 + $0x10] sm:$0xff pattern:$0x75316420]
        %v942 = vld.sshfl [vmem:[#allocation1 + $0x18] sm:$0xff pattern:$0x75316420]
        %v943 = vld.sshfl [vmem:[#allocation1 + $0x20] sm:$0xff pattern:$0x75316420]
        %v944 = vld.sshfl [vmem:[#allocation1 + $0x28] sm:$0xff pattern:$0x75316420]
        %v946 = vsel %vm223, %v776, 0
        %v948 = vsel %vm227, %v939, 0
        %v950 = vsel %vm227, %v940, 0
        %v952 = vsel %vm227, %v941, 0
        %v954 = vsel %vm227, %v942, 0
        %v956 = vsel %vm227, %v943, 0
        %v958 = vsel %vm227, %v944, 0
        %960 = vmatpush.msra.mxu0 0.0
        %961 = vmatpush.msra.mxu0 0.0
        %962 = vmatpush.msra.mxu0 0.0
        %963 = vmatpush.msra.mxu0 0.0
        %964 = vmatpush.msra.mxu0 0.0
        %965 = vmatpush.msra.mxu0 0.0
        %966 = vmatpush.msra.mxu0 0.0
        %967 = vmatpush.msra.mxu0 0.0
        %968 = vmatpush.msra.mxu0 0.0
        %969 = vmatpush.msra.mxu0 0.0
        %970 = vmatpush.msra.mxu0 0.0
        %971 = vmatpush.msra.mxu0 0.0
        %972 = vmatpush.msra.mxu0 0.0
        %973 = vmatpush.msra.mxu0 0.0
        %974 = vmatpush.msra.mxu0 0.0
        %975 = vmatpush.msra.mxu0 %v948
        %976 = vmatmul.f32.gmra.mxu0 %v946
        %v977 = vpop.f32.mrf.mxu0
        %v978 = vadd.f32 %v829, %v977
        %979 = vdwg.mxu0
        %980 = vmatpush.msra.mxu0 0.0
        %981 = vmatpush.msra.mxu0 0.0
        %982 = vmatpush.msra.mxu0 0.0
        %983 = vmatpush.msra.mxu0 0.0
        %984 = vmatpush.msra.mxu0 0.0
        %985 = vmatpush.msra.mxu0 0.0
        %986 = vmatpush.msra.mxu0 0.0
        %987 = vmatpush.msra.mxu0 0.0
        %988 = vmatpush.msra.mxu0 0.0
        %989 = vmatpush.msra.mxu0 0.0
        %990 = vmatpush.msra.mxu0 0.0
        %991 = vmatpush.msra.mxu0 0.0
        %992 = vmatpush.msra.mxu0 0.0
        %993 = vmatpush.msra.mxu0 0.0
        %994 = vmatpush.msra.mxu0 0.0
        %995 = vmatpush.msra.mxu0 %v950
        %996 = vmatmul.f32.gmra.mxu0 %v946
        %v997 = vpop.f32.mrf.mxu0
        %v998 = vadd.f32 %v849, %v997
        %999 = vdwg.mxu0
        %1000 = vmatpush.msra.mxu0 0.0
        %1001 = vmatpush.msra.mxu0 0.0
        %1002 = vmatpush.msra.mxu0 0.0
        %1003 = vmatpush.msra.mxu0 0.0
        %1004 = vmatpush.msra.mxu0 0.0
        %1005 = vmatpush.msra.mxu0 0.0
        %1006 = vmatpush.msra.mxu0 0.0
        %1007 = vmatpush.msra.mxu0 0.0
        %1008 = vmatpush.msra.mxu0 0.0
        %1009 = vmatpush.msra.mxu0 0.0
        %1010 = vmatpush.msra.mxu0 0.0
        %1011 = vmatpush.msra.mxu0 0.0
        %1012 = vmatpush.msra.mxu0 0.0
        %1013 = vmatpush.msra.mxu0 0.0
        %1014 = vmatpush.msra.mxu0 0.0
        %1015 = vmatpush.msra.mxu0 %v952
        %1016 = vmatmul.f32.gmra.mxu0 %v946
        %v1017 = vpop.f32.mrf.mxu0
        %v1018 = vadd.f32 %v869, %v1017
        %1019 = vdwg.mxu0
        %1020 = vmatpush.msra.mxu0 0.0
        %1021 = vmatpush.msra.mxu0 0.0
        %1022 = vmatpush.msra.mxu0 0.0
        %1023 = vmatpush.msra.mxu0 0.0
        %1024 = vmatpush.msra.mxu0 0.0
        %1025 = vmatpush.msra.mxu0 0.0
        %1026 = vmatpush.msra.mxu0 0.0
        %1027 = vmatpush.msra.mxu0 0.0
        %1028 = vmatpush.msra.mxu0 0.0
        %1029 = vmatpush.msra.mxu0 0.0
        %1030 = vmatpush.msra.mxu0 0.0
        %1031 = vmatpush.msra.mxu0 0.0
        %1032 = vmatpush.msra.mxu0 0.0
        %1033 = vmatpush.msra.mxu0 0.0
        %1034 = vmatpush.msra.mxu0 0.0
        %1035 = vmatpush.msra.mxu0 %v954
        %1036 = vmatmul.f32.gmra.mxu0 %v946
        %v1037 = vpop.f32.mrf.mxu0
        %v1038 = vadd.f32 %v889, %v1037
        %1039 = vdwg.mxu0
        %1040 = vmatpush.msra.mxu0 0.0
        %1041 = vmatpush.msra.mxu0 0.0
        %1042 = vmatpush.msra.mxu0 0.0
        %1043 = vmatpush.msra.mxu0 0.0
        %1044 = vmatpush.msra.mxu0 0.0
        %1045 = vmatpush.msra.mxu0 0.0
        %1046 = vmatpush.msra.mxu0 0.0
        %1047 = vmatpush.msra.mxu0 0.0
        %1048 = vmatpush.msra.mxu0 0.0
        %1049 = vmatpush.msra.mxu0 0.0
        %1050 = vmatpush.msra.mxu0 0.0
        %1051 = vmatpush.msra.mxu0 0.0
        %1052 = vmatpush.msra.mxu0 0.0
        %1053 = vmatpush.msra.mxu0 0.0
        %1054 = vmatpush.msra.mxu0 0.0
        %1055 = vmatpush.msra.mxu0 %v956
        %1056 = vmatmul.f32.gmra.mxu0 %v946
        %v1057 = vpop.f32.mrf.mxu0
        %v1058 = vadd.f32 %v909, %v1057
        %1059 = vdwg.mxu0
        %1060 = vmatpush.msra.mxu0 0.0
        %1061 = vmatpush.msra.mxu0 0.0
        %1062 = vmatpush.msra.mxu0 0.0
        %1063 = vmatpush.msra.mxu0 0.0
        %1064 = vmatpush.msra.mxu0 0.0
        %1065 = vmatpush.msra.mxu0 0.0
        %1066 = vmatpush.msra.mxu0 0.0
        %1067 = vmatpush.msra.mxu0 0.0
        %1068 = vmatpush.msra.mxu0 0.0
        %1069 = vmatpush.msra.mxu0 0.0
        %1070 = vmatpush.msra.mxu0 0.0
        %1071 = vmatpush.msra.mxu0 0.0
        %1072 = vmatpush.msra.mxu0 0.0
        %1073 = vmatpush.msra.mxu0 0.0
        %1074 = vmatpush.msra.mxu0 0.0
        %1075 = vmatpush.msra.mxu0 %v958
        %1076 = vmatmul.f32.gmra.mxu0 %v946
        %v1077 = vpop.f32.mrf.mxu0
        %v1078 = vadd.f32 %v929, %v1077
        %1079 = vdwg.mxu0
        %v1080 = vld [vmem:[%s168 + $0x8] sm:$0xff]
        %v1081 = vld [vmem:[%s168 + $0x10] sm:$0xff]
        %v1082 = vld [vmem:[%s168 + $0x18] sm:$0xff]
        %s1083 = scalar_lea.vmem %s1, 40
        %v1084 = vld [vmem:[%s1083] sm:$0xff]
        %1088 = vst [vmem:[#allocation1] ss:$2 sm:$0xff] %v1080
        %s1089 = scalar_lea.vmem [#allocation1], 16
        %1090 = vst [vmem:[%s1089] ss:$2 sm:$0xff] %v1081
        %s1091 = scalar_lea.vmem [#allocation1], 32
        %1092 = vst [vmem:[%s1091] ss:$2 sm:$0xff] %v1082
        %v1093 = vld.sshfl [vmem:[#allocation1] sm:$0xff pattern:$0x75316420]
        %v1094 = vld.sshfl [vmem:[#allocation1 + $0x8] sm:$0xff pattern:$0x75316420]
        %v1095 = vld.sshfl [vmem:[#allocation1 + $0x10] sm:$0xff pattern:$0x75316420]
        %v1096 = vld.sshfl [vmem:[#allocation1 + $0x18] sm:$0xff pattern:$0x75316420]
        %v1097 = vld.sshfl [vmem:[#allocation1 + $0x20] sm:$0xff pattern:$0x75316420]
        %v1098 = vld.sshfl [vmem:[#allocation1 + $0x28] sm:$0xff pattern:$0x75316420]
        %v1100 = vsel %vm223, %v1084, 0
        %v1102 = vsel %vm227, %v1093, 0
        %v1104 = vsel %vm227, %v1094, 0
        %v1106 = vsel %vm227, %v1095, 0
        %v1108 = vsel %vm227, %v1096, 0
        %v1110 = vsel %vm227, %v1097, 0
        %v1112 = vsel %vm227, %v1098, 0
        %1114 = vmatpush.msra.mxu0 0.0
        %1115 = vmatpush.msra.mxu0 0.0
        %1116 = vmatpush.msra.mxu0 0.0
        %1117 = vmatpush.msra.mxu0 0.0
        %1118 = vmatpush.msra.mxu0 0.0
        %1119 = vmatpush.msra.mxu0 0.0
        %1120 = vmatpush.msra.mxu0 0.0
        %1121 = vmatpush.msra.mxu0 0.0
        %1122 = vmatpush.msra.mxu0 0.0
        %1123 = vmatpush.msra.mxu0 0.0
        %1124 = vmatpush.msra.mxu0 0.0
        %1125 = vmatpush.msra.mxu0 0.0
        %1126 = vmatpush.msra.mxu0 0.0
        %1127 = vmatpush.msra.mxu0 0.0
        %1128 = vmatpush.msra.mxu0 0.0
        %1129 = vmatpush.msra.mxu0 %v1102
        %1130 = vmatmul.f32.gmra.mxu0 %v1100
        %v1131 = vpop.f32.mrf.mxu0
        %v1132 = vadd.f32 0.0, %v1131
        %1133 = vdwg.mxu0
        %1134 = vmatpush.msra.mxu0 0.0
        %1135 = vmatpush.msra.mxu0 0.0
        %1136 = vmatpush.msra.mxu0 0.0
        %1137 = vmatpush.msra.mxu0 0.0
        %1138 = vmatpush.msra.mxu0 0.0
        %1139 = vmatpush.msra.mxu0 0.0
        %1140 = vmatpush.msra.mxu0 0.0
        %1141 = vmatpush.msra.mxu0 0.0
        %1142 = vmatpush.msra.mxu0 0.0
        %1143 = vmatpush.msra.mxu0 0.0
        %1144 = vmatpush.msra.mxu0 0.0
        %1145 = vmatpush.msra.mxu0 0.0
        %1146 = vmatpush.msra.mxu0 0.0
        %1147 = vmatpush.msra.mxu0 0.0
        %1148 = vmatpush.msra.mxu0 0.0
        %1149 = vmatpush.msra.mxu0 %v1104
        %1150 = vmatmul.f32.gmra.mxu0 %v1100
        %v1151 = vpop.f32.mrf.mxu0
        %v1152 = vadd.f32 0.0, %v1151
        %1153 = vdwg.mxu0
        %1154 = vmatpush.msra.mxu0 0.0
        %1155 = vmatpush.msra.mxu0 0.0
        %1156 = vmatpush.msra.mxu0 0.0
        %1157 = vmatpush.msra.mxu0 0.0
        %1158 = vmatpush.msra.mxu0 0.0
        %1159 = vmatpush.msra.mxu0 0.0
        %1160 = vmatpush.msra.mxu0 0.0
        %1161 = vmatpush.msra.mxu0 0.0
        %1162 = vmatpush.msra.mxu0 0.0
        %1163 = vmatpush.msra.mxu0 0.0
        %1164 = vmatpush.msra.mxu0 0.0
        %1165 = vmatpush.msra.mxu0 0.0
        %1166 = vmatpush.msra.mxu0 0.0
        %1167 = vmatpush.msra.mxu0 0.0
        %1168 = vmatpush.msra.mxu0 0.0
        %1169 = vmatpush.msra.mxu0 %v1106
        %1170 = vmatmul.f32.gmra.mxu0 %v1100
        %v1171 = vpop.f32.mrf.mxu0
        %v1172 = vadd.f32 0.0, %v1171
        %1173 = vdwg.mxu0
        %1174 = vmatpush.msra.mxu0 0.0
        %1175 = vmatpush.msra.mxu0 0.0
        %1176 = vmatpush.msra.mxu0 0.0
        %1177 = vmatpush.msra.mxu0 0.0
        %1178 = vmatpush.msra.mxu0 0.0
        %1179 = vmatpush.msra.mxu0 0.0
        %1180 = vmatpush.msra.mxu0 0.0
        %1181 = vmatpush.msra.mxu0 0.0
        %1182 = vmatpush.msra.mxu0 0.0
        %1183 = vmatpush.msra.mxu0 0.0
        %1184 = vmatpush.msra.mxu0 0.0
        %1185 = vmatpush.msra.mxu0 0.0
        %1186 = vmatpush.msra.mxu0 0.0
        %1187 = vmatpush.msra.mxu0 0.0
        %1188 = vmatpush.msra.mxu0 0.0
        %1189 = vmatpush.msra.mxu0 %v1108
        %1190 = vmatmul.f32.gmra.mxu0 %v1100
        %v1191 = vpop.f32.mrf.mxu0
        %v1192 = vadd.f32 0.0, %v1191
        %1193 = vdwg.mxu0
        %1194 = vmatpush.msra.mxu0 0.0
        %1195 = vmatpush.msra.mxu0 0.0
        %1196 = vmatpush.msra.mxu0 0.0
        %1197 = vmatpush.msra.mxu0 0.0
        %1198 = vmatpush.msra.mxu0 0.0
        %1199 = vmatpush.msra.mxu0 0.0
        %1200 = vmatpush.msra.mxu0 0.0
        %1201 = vmatpush.msra.mxu0 0.0
        %1202 = vmatpush.msra.mxu0 0.0
        %1203 = vmatpush.msra.mxu0 0.0
        %1204 = vmatpush.msra.mxu0 0.0
        %1205 = vmatpush.msra.mxu0 0.0
        %1206 = vmatpush.msra.mxu0 0.0
        %1207 = vmatpush.msra.mxu0 0.0
        %1208 = vmatpush.msra.mxu0 0.0
        %1209 = vmatpush.msra.mxu0 %v1110
        %1210 = vmatmul.f32.gmra.mxu0 %v1100
        %v1211 = vpop.f32.mrf.mxu0
        %v1212 = vadd.f32 0.0, %v1211
        %1213 = vdwg.mxu0
        %1214 = vmatpush.msra.mxu0 0.0
        %1215 = vmatpush.msra.mxu0 0.0
        %1216 = vmatpush.msra.mxu0 0.0
        %1217 = vmatpush.msra.mxu0 0.0
        %1218 = vmatpush.msra.mxu0 0.0
        %1219 = vmatpush.msra.mxu0 0.0
        %1220 = vmatpush.msra.mxu0 0.0
        %1221 = vmatpush.msra.mxu0 0.0
        %1222 = vmatpush.msra.mxu0 0.0
        %1223 = vmatpush.msra.mxu0 0.0
        %1224 = vmatpush.msra.mxu0 0.0
        %1225 = vmatpush.msra.mxu0 0.0
        %1226 = vmatpush.msra.mxu0 0.0
        %1227 = vmatpush.msra.mxu0 0.0
        %1228 = vmatpush.msra.mxu0 0.0
        %1229 = vmatpush.msra.mxu0 %v1112
        %1230 = vmatmul.f32.gmra.mxu0 %v1100
        %v1231 = vpop.f32.mrf.mxu0
        %v1232 = vadd.f32 0.0, %v1231
        %1233 = vdwg.mxu0
        %v1234 = vadd.f32 %v978, %v1132
        %v1235 = vadd.f32 %v998, %v1152
        %v1236 = vadd.f32 %v1018, %v1172
        %v1237 = vadd.f32 %v1038, %v1192
        %v1238 = vadd.f32 %v1058, %v1212
        %v1239 = vadd.f32 %v1078, %v1232
        %s1240 = scalar_lea.vmem %s2, 8
        %v1241 = vld [vmem:[%s1240] sm:$0xff]
        %1243 = vset.pattern.permute.xlu0 0
        %1244 = vperm.xlu0 %1243, %v1241
        %v1245 = vpop.permute.xlu0 %1244
        %v1247 = vadd.f32 %v1234, %v1245
        %v1248 = vadd.f32 %v1235, %v1245
        %v1249 = vadd.f32 %v1236, %v1245
        %v1250 = vadd.f32 %v1237, %v1245
        %v1251 = vadd.f32 %v1238, %v1245
        %v1252 = vadd.f32 %v1239, %v1245
        %v1253 = vmax.f32 %v1247, 0.0
        %v1254 = vmax.f32 %v1248, 0.0
        %v1255 = vmax.f32 %v1249, 0.0
        %v1256 = vmax.f32 %v1250, 0.0
        %v1257 = vmax.f32 %v1251, 0.0
        %v1258 = vmax.f32 %v1252, 0.0
        %1259 = vst [vmem:[%s163 + $0x38] sm:$0xff] %v1253
        %1260 = vst [vmem:[%s163 + $0x40] sm:$0xff] %v1254
        %1261 = vst [vmem:[%s163 + $0x48] sm:$0xff] %v1255
        %1262 = vst [vmem:[%s163 + $0x50] sm:$0xff] %v1256
        %1263 = vst [vmem:[%s163 + $0x58] sm:$0xff] %v1257
        %1264 = vst [vmem:[%s163 + $0x60] sm:$0xff] %v1258
        %v1265 = vld [vmem:[%s168] sm:$0xff]
        %v1266 = vld [vmem:[%s168 + $0x8] sm:$0xff]
        %v1267 = vld [vmem:[%s168 + $0x10] sm:$0xf]
        %s1268 = scalar_lea.vmem %s1, 48
        %v1269 = vld [vmem:[%s1268] sm:$0xff]
        %v1270 = vld [vmem:[%s168 + $0x4] sm:$0xff]
        %v1271 = vld [vmem:[%s168 + $0xc] sm:$0xff]
        %v1272 = vld [vmem:[%s168 + $0x14] sm:$0xff]
        %s1273 = scalar_lea.vmem %s1, 56
        %v1274 = vld [vmem:[%s1273] sm:$0xff]
        %1278 = vst [vmem:[#allocation1] ss:$2 sm:$0xff] %v1270
        %s1279 = scalar_lea.vmem [#allocation1], 16
        %1280 = vst [vmem:[%s1279] ss:$2 sm:$0xff] %v1271
        %s1281 = scalar_lea.vmem [#allocation1], 32
        %1282 = vst [vmem:[%s1281] ss:$2 sm:$0xff] %v1272
        %v1283 = vld.sshfl [vmem:[#allocation1] sm:$0xff pattern:$0x75316420]
        %v1284 = vld.sshfl [vmem:[#allocation1 + $0x8] sm:$0xff pattern:$0x75316420]
        %v1285 = vld.sshfl [vmem:[#allocation1 + $0x10] sm:$0xff pattern:$0x75316420]
        %v1286 = vld.sshfl [vmem:[#allocation1 + $0x18] sm:$0xff pattern:$0x75316420]
        %v1287 = vld.sshfl [vmem:[#allocation1 + $0x20] sm:$0xff pattern:$0x75316420]
        %v1288 = vld.sshfl [vmem:[#allocation1 + $0x28] sm:$0xff pattern:$0x75316420]
        %1289 = vrot.lane.b32.xlu0 %v1283, 64
        %v1290 = vpop.permute.xlu0 %1289
        %1291 = vrot.lane.b32.xlu0 %v1284, 64
        %v1292 = vpop.permute.xlu0 %1291
        %1293 = vrot.lane.b32.xlu0 %v1285, 64
        %v1294 = vpop.permute.xlu0 %1293
        %1295 = vrot.lane.b32.xlu0 %v1286, 64
        %v1296 = vpop.permute.xlu0 %1295
        %1297 = vrot.lane.b32.xlu0 %v1287, 64
        %v1298 = vpop.permute.xlu0 %1297
        %1299 = vrot.lane.b32.xlu0 %v1288, 64
        %v1300 = vpop.permute.xlu0 %1299
        %v1301 = vsel %vm215, %v1290, %v1292
        %v1302 = vsel %vm215, %v1292, %v1294
        %v1303 = vsel %vm215, %v1294, %v1296
        %v1304 = vsel %vm215, %v1296, %v1298
        %v1305 = vsel %vm215, %v1298, %v1300
        %v1307 = vsel %vm223, %v1274, 0
        %v1309 = vsel %vm227, %v1301, 0
        %v1311 = vsel %vm227, %v1302, 0
        %v1313 = vsel %vm227, %v1303, 0
        %v1315 = vsel %vm227, %v1304, 0
        %v1317 = vsel %vm227, %v1305, 0
        %1319 = vmatpush.msra.mxu0 0.0
        %1320 = vmatpush.msra.mxu0 0.0
        %1321 = vmatpush.msra.mxu0 0.0
        %1322 = vmatpush.msra.mxu0 0.0
        %1323 = vmatpush.msra.mxu0 0.0
        %1324 = vmatpush.msra.mxu0 0.0
        %1325 = vmatpush.msra.mxu0 0.0
        %1326 = vmatpush.msra.mxu0 0.0
        %1327 = vmatpush.msra.mxu0 0.0
        %1328 = vmatpush.msra.mxu0 0.0
        %1329 = vmatpush.msra.mxu0 0.0
        %1330 = vmatpush.msra.mxu0 0.0
        %1331 = vmatpush.msra.mxu0 0.0
        %1332 = vmatpush.msra.mxu0 0.0
        %1333 = vmatpush.msra.mxu0 0.0
        %1334 = vmatpush.msra.mxu0 %v1309
        %1335 = vmatmul.f32.gmra.mxu0 %v1307
        %v1336 = vpop.f32.mrf.mxu0
        %v1337 = vadd.f32 0.0, %v1336
        %1338 = vdwg.mxu0
        %1339 = vmatpush.msra.mxu0 0.0
        %1340 = vmatpush.msra.mxu0 0.0
        %1341 = vmatpush.msra.mxu0 0.0
        %1342 = vmatpush.msra.mxu0 0.0
        %1343 = vmatpush.msra.mxu0 0.0
        %1344 = vmatpush.msra.mxu0 0.0
        %1345 = vmatpush.msra.mxu0 0.0
        %1346 = vmatpush.msra.mxu0 0.0
        %1347 = vmatpush.msra.mxu0 0.0
        %1348 = vmatpush.msra.mxu0 0.0
        %1349 = vmatpush.msra.mxu0 0.0
        %1350 = vmatpush.msra.mxu0 0.0
        %1351 = vmatpush.msra.mxu0 0.0
        %1352 = vmatpush.msra.mxu0 0.0
        %1353 = vmatpush.msra.mxu0 0.0
        %1354 = vmatpush.msra.mxu0 %v1311
        %1355 = vmatmul.f32.gmra.mxu0 %v1307
        %v1356 = vpop.f32.mrf.mxu0
        %v1357 = vadd.f32 0.0, %v1356
        %1358 = vdwg.mxu0
        %1359 = vmatpush.msra.mxu0 0.0
        %1360 = vmatpush.msra.mxu0 0.0
        %1361 = vmatpush.msra.mxu0 0.0
        %1362 = vmatpush.msra.mxu0 0.0
        %1363 = vmatpush.msra.mxu0 0.0
        %1364 = vmatpush.msra.mxu0 0.0
        %1365 = vmatpush.msra.mxu0 0.0
        %1366 = vmatpush.msra.mxu0 0.0
        %1367 = vmatpush.msra.mxu0 0.0
        %1368 = vmatpush.msra.mxu0 0.0
        %1369 = vmatpush.msra.mxu0 0.0
        %1370 = vmatpush.msra.mxu0 0.0
        %1371 = vmatpush.msra.mxu0 0.0
        %1372 = vmatpush.msra.mxu0 0.0
        %1373 = vmatpush.msra.mxu0 0.0
        %1374 = vmatpush.msra.mxu0 %v1313
        %1375 = vmatmul.f32.gmra.mxu0 %v1307
        %v1376 = vpop.f32.mrf.mxu0
        %v1377 = vadd.f32 0.0, %v1376
        %1378 = vdwg.mxu0
        %1379 = vmatpush.msra.mxu0 0.0
        %1380 = vmatpush.msra.mxu0 0.0
        %1381 = vmatpush.msra.mxu0 0.0
        %1382 = vmatpush.msra.mxu0 0.0
        %1383 = vmatpush.msra.mxu0 0.0
        %1384 = vmatpush.msra.mxu0 0.0
        %1385 = vmatpush.msra.mxu0 0.0
        %1386 = vmatpush.msra.mxu0 0.0
        %1387 = vmatpush.msra.mxu0 0.0
        %1388 = vmatpush.msra.mxu0 0.0
        %1389 = vmatpush.msra.mxu0 0.0
        %1390 = vmatpush.msra.mxu0 0.0
        %1391 = vmatpush.msra.mxu0 0.0
        %1392 = vmatpush.msra.mxu0 0.0
        %1393 = vmatpush.msra.mxu0 0.0
        %1394 = vmatpush.msra.mxu0 %v1315
        %1395 = vmatmul.f32.gmra.mxu0 %v1307
        %v1396 = vpop.f32.mrf.mxu0
        %v1397 = vadd.f32 0.0, %v1396
        %1398 = vdwg.mxu0
        %1399 = vmatpush.msra.mxu0 0.0
        %1400 = vmatpush.msra.mxu0 0.0
        %1401 = vmatpush.msra.mxu0 0.0
        %1402 = vmatpush.msra.mxu0 0.0
        %1403 = vmatpush.msra.mxu0 0.0
        %1404 = vmatpush.msra.mxu0 0.0
        %1405 = vmatpush.msra.mxu0 0.0
        %1406 = vmatpush.msra.mxu0 0.0
        %1407 = vmatpush.msra.mxu0 0.0
        %1408 = vmatpush.msra.mxu0 0.0
        %1409 = vmatpush.msra.mxu0 0.0
        %1410 = vmatpush.msra.mxu0 0.0
        %1411 = vmatpush.msra.mxu0 0.0
        %1412 = vmatpush.msra.mxu0 0.0
        %1413 = vmatpush.msra.mxu0 0.0
        %1414 = vmatpush.msra.mxu0 %v1317
        %1415 = vmatmul.f32.gmra.mxu0 %v1307
        %v1416 = vpop.f32.mrf.mxu0
        %v1417 = vadd.f32 0.0, %v1416
        %1418 = vdwg.mxu0
        %1422 = vst [vmem:[#allocation1] ss:$2 sm:$0xff] %v1265
        %s1423 = scalar_lea.vmem [#allocation1], 16
        %1424 = vst [vmem:[%s1423] ss:$2 sm:$0xff] %v1266
        %s1425 = scalar_lea.vmem [#allocation1], 32
        %1426 = vst [vmem:[%s1425] ss:$2 sm:$0xff] %v1267
        %v1427 = vld.sshfl [vmem:[#allocation1] sm:$0xff pattern:$0x75316420]
        %v1428 = vld.sshfl [vmem:[#allocation1 + $0x8] sm:$0xff pattern:$0x75316420]
        %v1429 = vld.sshfl [vmem:[#allocation1 + $0x10] sm:$0xff pattern:$0x75316420]
        %v1430 = vld.sshfl [vmem:[#allocation1 + $0x18] sm:$0xff pattern:$0x75316420]
        %v1431 = vld.sshfl [vmem:[#allocation1 + $0x20] sm:$0xff pattern:$0x75316420]
        %v1433 = vsel %vm223, %v1269, 0
        %v1435 = vsel %vm227, %v1427, 0
        %v1437 = vsel %vm227, %v1428, 0
        %v1439 = vsel %vm227, %v1429, 0
        %v1441 = vsel %vm227, %v1430, 0
        %v1443 = vsel %vm227, %v1431, 0
        %1445 = vmatpush.msra.mxu0 0.0
        %1446 = vmatpush.msra.mxu0 0.0
        %1447 = vmatpush.msra.mxu0 0.0
        %1448 = vmatpush.msra.mxu0 0.0
        %1449 = vmatpush.msra.mxu0 0.0
        %1450 = vmatpush.msra.mxu0 0.0
        %1451 = vmatpush.msra.mxu0 0.0
        %1452 = vmatpush.msra.mxu0 0.0
        %1453 = vmatpush.msra.mxu0 0.0
        %1454 = vmatpush.msra.mxu0 0.0
        %1455 = vmatpush.msra.mxu0 0.0
        %1456 = vmatpush.msra.mxu0 0.0
        %1457 = vmatpush.msra.mxu0 0.0
        %1458 = vmatpush.msra.mxu0 0.0
        %1459 = vmatpush.msra.mxu0 0.0
        %1460 = vmatpush.msra.mxu0 %v1435
        %1461 = vmatmul.f32.gmra.mxu0 %v1433
        %v1462 = vpop.f32.mrf.mxu0
        %v1463 = vadd.f32 %v1337, %v1462
        %1464 = vdwg.mxu0
        %1465 = vmatpush.msra.mxu0 0.0
        %1466 = vmatpush.msra.mxu0 0.0
        %1467 = vmatpush.msra.mxu0 0.0
        %1468 = vmatpush.msra.mxu0 0.0
        %1469 = vmatpush.msra.mxu0 0.0
        %1470 = vmatpush.msra.mxu0 0.0
        %1471 = vmatpush.msra.mxu0 0.0
        %1472 = vmatpush.msra.mxu0 0.0
        %1473 = vmatpush.msra.mxu0 0.0
        %1474 = vmatpush.msra.mxu0 0.0
        %1475 = vmatpush.msra.mxu0 0.0
        %1476 = vmatpush.msra.mxu0 0.0
        %1477 = vmatpush.msra.mxu0 0.0
        %1478 = vmatpush.msra.mxu0 0.0
        %1479 = vmatpush.msra.mxu0 0.0
        %1480 = vmatpush.msra.mxu0 %v1437
        %1481 = vmatmul.f32.gmra.mxu0 %v1433
        %v1482 = vpop.f32.mrf.mxu0
        %v1483 = vadd.f32 %v1357, %v1482
        %1484 = vdwg.mxu0
        %1485 = vmatpush.msra.mxu0 0.0
        %1486 = vmatpush.msra.mxu0 0.0
        %1487 = vmatpush.msra.mxu0 0.0
        %1488 = vmatpush.msra.mxu0 0.0
        %1489 = vmatpush.msra.mxu0 0.0
        %1490 = vmatpush.msra.mxu0 0.0
        %1491 = vmatpush.msra.mxu0 0.0
        %1492 = vmatpush.msra.mxu0 0.0
        %1493 = vmatpush.msra.mxu0 0.0
        %1494 = vmatpush.msra.mxu0 0.0
        %1495 = vmatpush.msra.mxu0 0.0
        %1496 = vmatpush.msra.mxu0 0.0
        %1497 = vmatpush.msra.mxu0 0.0
        %1498 = vmatpush.msra.mxu0 0.0
        %1499 = vmatpush.msra.mxu0 0.0
        %1500 = vmatpush.msra.mxu0 %v1439
        %1501 = vmatmul.f32.gmra.mxu0 %v1433
        %v1502 = vpop.f32.mrf.mxu0
        %v1503 = vadd.f32 %v1377, %v1502
        %1504 = vdwg.mxu0
        %1505 = vmatpush.msra.mxu0 0.0
        %1506 = vmatpush.msra.mxu0 0.0
        %1507 = vmatpush.msra.mxu0 0.0
        %1508 = vmatpush.msra.mxu0 0.0
        %1509 = vmatpush.msra.mxu0 0.0
        %1510 = vmatpush.msra.mxu0 0.0
        %1511 = vmatpush.msra.mxu0 0.0
        %1512 = vmatpush.msra.mxu0 0.0
        %1513 = vmatpush.msra.mxu0 0.0
        %1514 = vmatpush.msra.mxu0 0.0
        %1515 = vmatpush.msra.mxu0 0.0
        %1516 = vmatpush.msra.mxu0 0.0
        %1517 = vmatpush.msra.mxu0 0.0
        %1518 = vmatpush.msra.mxu0 0.0
        %1519 = vmatpush.msra.mxu0 0.0
        %1520 = vmatpush.msra.mxu0 %v1441
        %1521 = vmatmul.f32.gmra.mxu0 %v1433
        %v1522 = vpop.f32.mrf.mxu0
        %v1523 = vadd.f32 %v1397, %v1522
        %1524 = vdwg.mxu0
        %1525 = vmatpush.msra.mxu0 0.0
        %1526 = vmatpush.msra.mxu0 0.0
        %1527 = vmatpush.msra.mxu0 0.0
        %1528 = vmatpush.msra.mxu0 0.0
        %1529 = vmatpush.msra.mxu0 0.0
        %1530 = vmatpush.msra.mxu0 0.0
        %1531 = vmatpush.msra.mxu0 0.0
        %1532 = vmatpush.msra.mxu0 0.0
        %1533 = vmatpush.msra.mxu0 0.0
        %1534 = vmatpush.msra.mxu0 0.0
        %1535 = vmatpush.msra.mxu0 0.0
        %1536 = vmatpush.msra.mxu0 0.0
        %1537 = vmatpush.msra.mxu0 0.0
        %1538 = vmatpush.msra.mxu0 0.0
        %1539 = vmatpush.msra.mxu0 0.0
        %1540 = vmatpush.msra.mxu0 %v1443
        %1541 = vmatmul.f32.gmra.mxu0 %v1433
        %v1542 = vpop.f32.mrf.mxu0
        %v1543 = vadd.f32 %v1417, %v1542
        %1544 = vdwg.mxu0
        %v1545 = vld [vmem:[%s168 + $0xc] sm:$0xff]
        %v1546 = vld [vmem:[%s168 + $0x14] sm:$0xff]
        %v1547 = vld [vmem:[%s168 + $0x1c] sm:$0xf]
        %s1548 = scalar_lea.vmem %s1, 64
        %v1549 = vld [vmem:[%s1548] sm:$0xff]
        %1553 = vst [vmem:[#allocation1] ss:$2 sm:$0xff] %v1545
        %s1554 = scalar_lea.vmem [#allocation1], 16
        %1555 = vst [vmem:[%s1554] ss:$2 sm:$0xff] %v1546
        %s1556 = scalar_lea.vmem [#allocation1], 32
        %1557 = vst [vmem:[%s1556] ss:$2 sm:$0xff] %v1547
        %v1558 = vld.sshfl [vmem:[#allocation1] sm:$0xff pattern:$0x75316420]
        %v1559 = vld.sshfl [vmem:[#allocation1 + $0x8] sm:$0xff pattern:$0x75316420]
        %v1560 = vld.sshfl [vmem:[#allocation1 + $0x10] sm:$0xff pattern:$0x75316420]
        %v1561 = vld.sshfl [vmem:[#allocation1 + $0x18] sm:$0xff pattern:$0x75316420]
        %v1562 = vld.sshfl [vmem:[#allocation1 + $0x20] sm:$0xff pattern:$0x75316420]
        %v1564 = vsel %vm223, %v1549, 0
        %v1566 = vsel %vm227, %v1558, 0
        %v1568 = vsel %vm227, %v1559, 0
        %v1570 = vsel %vm227, %v1560, 0
        %v1572 = vsel %vm227, %v1561, 0
        %v1574 = vsel %vm227, %v1562, 0
        %1576 = vmatpush.msra.mxu0 0.0
        %1577 = vmatpush.msra.mxu0 0.0
        %1578 = vmatpush.msra.mxu0 0.0
        %1579 = vmatpush.msra.mxu0 0.0
        %1580 = vmatpush.msra.mxu0 0.0
        %1581 = vmatpush.msra.mxu0 0.0
        %1582 = vmatpush.msra.mxu0 0.0
        %1583 = vmatpush.msra.mxu0 0.0
        %1584 = vmatpush.msra.mxu0 0.0
        %1585 = vmatpush.msra.mxu0 0.0
        %1586 = vmatpush.msra.mxu0 0.0
        %1587 = vmatpush.msra.mxu0 0.0
        %1588 = vmatpush.msra.mxu0 0.0
        %1589 = vmatpush.msra.mxu0 0.0
        %1590 = vmatpush.msra.mxu0 0.0
        %1591 = vmatpush.msra.mxu0 %v1566
        %1592 = vmatmul.f32.gmra.mxu0 %v1564
        %v1593 = vpop.f32.mrf.mxu0
        %v1594 = vadd.f32 0.0, %v1593
        %1595 = vdwg.mxu0
        %1596 = vmatpush.msra.mxu0 0.0
        %1597 = vmatpush.msra.mxu0 0.0
        %1598 = vmatpush.msra.mxu0 0.0
        %1599 = vmatpush.msra.mxu0 0.0
        %1600 = vmatpush.msra.mxu0 0.0
        %1601 = vmatpush.msra.mxu0 0.0
        %1602 = vmatpush.msra.mxu0 0.0
        %1603 = vmatpush.msra.mxu0 0.0
        %1604 = vmatpush.msra.mxu0 0.0
        %1605 = vmatpush.msra.mxu0 0.0
        %1606 = vmatpush.msra.mxu0 0.0
        %1607 = vmatpush.msra.mxu0 0.0
        %1608 = vmatpush.msra.mxu0 0.0
        %1609 = vmatpush.msra.mxu0 0.0
        %1610 = vmatpush.msra.mxu0 0.0
        %1611 = vmatpush.msra.mxu0 %v1568
        %1612 = vmatmul.f32.gmra.mxu0 %v1564
        %v1613 = vpop.f32.mrf.mxu0
        %v1614 = vadd.f32 0.0, %v1613
        %1615 = vdwg.mxu0
        %1616 = vmatpush.msra.mxu0 0.0
        %1617 = vmatpush.msra.mxu0 0.0
        %1618 = vmatpush.msra.mxu0 0.0
        %1619 = vmatpush.msra.mxu0 0.0
        %1620 = vmatpush.msra.mxu0 0.0
        %1621 = vmatpush.msra.mxu0 0.0
        %1622 = vmatpush.msra.mxu0 0.0
        %1623 = vmatpush.msra.mxu0 0.0
        %1624 = vmatpush.msra.mxu0 0.0
        %1625 = vmatpush.msra.mxu0 0.0
        %1626 = vmatpush.msra.mxu0 0.0
        %1627 = vmatpush.msra.mxu0 0.0
        %1628 = vmatpush.msra.mxu0 0.0
        %1629 = vmatpush.msra.mxu0 0.0
        %1630 = vmatpush.msra.mxu0 0.0
        %1631 = vmatpush.msra.mxu0 %v1570
        %1632 = vmatmul.f32.gmra.mxu0 %v1564
        %v1633 = vpop.f32.mrf.mxu0
        %v1634 = vadd.f32 0.0, %v1633
        %1635 = vdwg.mxu0
        %1636 = vmatpush.msra.mxu0 0.0
        %1637 = vmatpush.msra.mxu0 0.0
        %1638 = vmatpush.msra.mxu0 0.0
        %1639 = vmatpush.msra.mxu0 0.0
        %1640 = vmatpush.msra.mxu0 0.0
        %1641 = vmatpush.msra.mxu0 0.0
        %1642 = vmatpush.msra.mxu0 0.0
        %1643 = vmatpush.msra.mxu0 0.0
        %1644 = vmatpush.msra.mxu0 0.0
        %1645 = vmatpush.msra.mxu0 0.0
        %1646 = vmatpush.msra.mxu0 0.0
        %1647 = vmatpush.msra.mxu0 0.0
        %1648 = vmatpush.msra.mxu0 0.0
        %1649 = vmatpush.msra.mxu0 0.0
        %1650 = vmatpush.msra.mxu0 0.0
        %1651 = vmatpush.msra.mxu0 %v1572
        %1652 = vmatmul.f32.gmra.mxu0 %v1564
        %v1653 = vpop.f32.mrf.mxu0
        %v1654 = vadd.f32 0.0, %v1653
        %1655 = vdwg.mxu0
        %1656 = vmatpush.msra.mxu0 0.0
        %1657 = vmatpush.msra.mxu0 0.0
        %1658 = vmatpush.msra.mxu0 0.0
        %1659 = vmatpush.msra.mxu0 0.0
        %1660 = vmatpush.msra.mxu0 0.0
        %1661 = vmatpush.msra.mxu0 0.0
        %1662 = vmatpush.msra.mxu0 0.0
        %1663 = vmatpush.msra.mxu0 0.0
        %1664 = vmatpush.msra.mxu0 0.0
        %1665 = vmatpush.msra.mxu0 0.0
        %1666 = vmatpush.msra.mxu0 0.0
        %1667 = vmatpush.msra.mxu0 0.0
        %1668 = vmatpush.msra.mxu0 0.0
        %1669 = vmatpush.msra.mxu0 0.0
        %1670 = vmatpush.msra.mxu0 0.0
        %1671 = vmatpush.msra.mxu0 %v1574
        %1672 = vmatmul.f32.gmra.mxu0 %v1564
        %v1673 = vpop.f32.mrf.mxu0
        %v1674 = vadd.f32 0.0, %v1673
        %1675 = vdwg.mxu0
        %v1676 = vadd.f32 %v1463, %v1594
        %v1677 = vadd.f32 %v1483, %v1614
        %v1678 = vadd.f32 %v1503, %v1634
        %v1679 = vadd.f32 %v1523, %v1654
        %v1680 = vadd.f32 %v1543, %v1674
        %s1681 = scalar_lea.vmem %s2, 16
        %v1682 = vld [vmem:[%s1681] sm:$0xff]
        %1684 = vset.pattern.permute.xlu0 0
        %1685 = vperm.xlu0 %1684, %v1682
        %v1686 = vpop.permute.xlu0 %1685
        %v1688 = vadd.f32 %v1676, %v1686
        %v1689 = vadd.f32 %v1677, %v1686
        %v1690 = vadd.f32 %v1678, %v1686
        %v1691 = vadd.f32 %v1679, %v1686
        %v1692 = vadd.f32 %v1680, %v1686
        %v1693 = vmax.f32 %v1688, 0.0
        %v1694 = vmax.f32 %v1689, 0.0
        %v1695 = vmax.f32 %v1690, 0.0
        %v1696 = vmax.f32 %v1691, 0.0
        %v1697 = vmax.f32 %v1692, 0.0
        %1698 = vst [vmem:[%s163 + $0x68] sm:$0xff] %v1693
        %1699 = vst [vmem:[%s163 + $0x70] sm:$0xff] %v1694
        %1700 = vst [vmem:[%s163 + $0x78] sm:$0xff] %v1695
        %1701 = vst [vmem:[%s163 + $0x80] sm:$0xff] %v1696
        %1702 = vst [vmem:[%s163 + $0x88] sm:$0xff] %v1697
        %s1703 = sand.u32 %s93, 1
        %s1704 = scalar_lea.sflag [#allocation3], %s1703
        %s1705 = sand.u32 %s93, 1
        %s1706 = smul.addr %s1705, 144
        %s1707 = scalar_lea.vmem [#allocation2], %s1706
        // Predicated region
        $region33: #{tpu_custom_call.1} parent=31 // pred_check
          %p1708 = pneg %p103
        $region34: #{tpu_custom_call.1} parent=31 // pred_check_branch
          %1710 = sbr.rel (%p1708) target = $region36
        $region35: #{tpu_custom_call.1} parent=31 // pred_region
          %1712 = vsyncadd %s1704, 0
          %s1713 = smul.addr %s17, 18
          %s1714 = smul.addr %s1713, 8
          %s1715 = scalar_lea.hbm %s3, %s1714
          %s1717 = sshll.u32 %s1707, 4
          %s1718 = int_to_ptr.vmem [resolvable:$true] %s1717
          %s1719 = sshll.u32 %s1715, 4
          %s1720 = int_to_ptr.hbm [resolvable:$true] %s1719
          %1722 = dma.vmem_to_hbm [thread:$0]  %s1718, 2304, %s1720, %s1704
        $region36: #{tpu_custom_call.1} parent=31 // pred_fallthru
          _
      $region32: #{tpu_custom_call.1} parent=5 // pred_fallthru
        _
      %p1723 = scmp.le.s32.totalorder 2, %s12
      // Predicated region
      $region37: #{tpu_custom_call.1} parent=5 // pred_check
        %p1724 = pneg %p1723
      $region38: #{tpu_custom_call.1} parent=5 // pred_check_branch
        %1726 = sbr.rel (%p1724) target = $region40
      $region39: #{tpu_custom_call.1} parent=5 // pred_region
        %s1727 = ssub.s32 %s12, 2
        // Predicated region
        $region41: #{tpu_custom_call.1} parent=39 // pred_check
          %p1728 = pneg %p109
        $region42: #{tpu_custom_call.1} parent=39 // pred_check_branch
          %1730 = sbr.rel (%p1728) target = $region44
        $region43: #{tpu_custom_call.1} parent=39 // pred_region
          %s1731 = sand.u32 %s94, 1
          %s1732 = scalar_lea.sflag [#allocation3], %s1731
          %s1733 = sand.u32 %s94, 1
          %s1734 = smul.addr %s1733, 144
          %s1735 = scalar_lea.vmem [#allocation2], %s1734
          %1737 = dma.done %s1732, 2304
        $region44: #{tpu_custom_call.1} parent=39 // pred_fallthru
          _
      $region40: #{tpu_custom_call.1} parent=5 // pred_fallthru
        _
    $region6: #{tpu_custom_call.1} parent=1 // loop_footer
      %s16 = sadd.s32 1, %s12
    $region7: #{tpu_custom_call.1} parent=1 // loop_footer_branch
      %11 = sbr.rel target = $region3
    $region8: #{tpu_custom_call.1} parent=1 // loop_exit
      _
    %1738 = vsyncpa [#allocation3], 1
    %s1739 = scalar_lea.sflag [#allocation3], 1
    %1740 = vsyncpa %s1739, 1

</llo_original>
